<compile_context>
chip_gen: v5e
topology: v5e:2x2
jax: 0.10.0
libtpu: 0.0.40
codegen_flags: <defaults>
</compile_context>

<pallas_src>
import math

import jax
import jax.numpy as jnp
from jax import lax
from jax.experimental import pallas as pl
from jax.experimental.pallas import tpu as pltpu


# ---------------------------------------------------------------------------
# Fused kernel: GroupNorm(groups, C) + SiLU + Conv2d(C, C, k=3, s=2, p=1).
# One batch element per grid step.  Layout inside the kernel:
#   x0 / x1 : (HP, WP, 2C) bf16  -- zero-padded input, row parity 0 / 1,
#             lanes [0:C] = even padded columns, lanes [C:2C] = odd columns.
# ---------------------------------------------------------------------------
def _downsample_fused_call(N, H, W, C, HP, WP, HO, WO, groups, eps, dtype):
    GS = C // groups
    C2 = 2 * C
    inv_n = 1.0 / float(H * W * GS)        # real (un-padded) elements per group

    def kernel(x0_ref, x1_ref, gamma_ref, beta_ref, gmap_ref, gbc_ref,
               wa_ref, wb_ref, bias_ref, o_ref, y0_ref, y1_ref):
        # ---- Pass 1: per-lane sums for GroupNorm statistics (f32). ---------
        # Zero-padded border pixels contribute 0 to both sums, so summing the
        # padded parity blocks gives exactly the statistics of the real image.
        s_w = jnp.zeros((WP, C2), jnp.float32)
        ss_w = jnp.zeros((WP, C2), jnp.float32)
        for x_ref in (x0_ref, x1_ref):
            x = x_ref[...].astype(jnp.float32)
            s_w = s_w + jnp.sum(x, axis=0)
            ss_w = ss_w + jnp.sum(x * x, axis=0)
        s = jnp.sum(s_w, axis=0, keepdims=True)      # (1, 2C)
        ss = jnp.sum(ss_w, axis=0, keepdims=True)    # (1, 2C)

        # Group reduce + broadcast back to all 2C lanes via two tiny constant
        # matmuls (hoisted from the kernel; exact 0/1 values, f32 math).
        sg = jnp.dot(jnp.dot(s, gmap_ref[...], preferred_element_type=jnp.float32),
                     gbc_ref[...], preferred_element_type=jnp.float32)
        ssg = jnp.dot(jnp.dot(ss, gmap_ref[...], preferred_element_type=jnp.float32),
                      gbc_ref[...], preferred_element_type=jnp.float32)
        mean = sg * inv_n
        var = ssg * inv_n - mean * mean
        inv = lax.rsqrt(jnp.maximum(var, 0.0) + eps)
        scale = inv * gamma_ref[...]                 # (1, 2C)
        shift = beta_ref[...] - mean * scale         # (1, 2C)

        # ---- Pass 2: normalize + SiLU, cast to bf16, fix pad semantics. ----
        # Only two padded regions are ever read by the conv:
        #   * padded column 0  -> lanes [0:C] at column index 0 (both parities)
        #   * padded row 0     -> row 0 of the row-parity-0 buffer
        col = lax.broadcasted_iota(jnp.int32, (WP, C2), 0)
        lane = lax.broadcasted_iota(jnp.int32, (WP, C2), 1)
        colmask = jnp.where((col == 0) & (lane < C), 0.0, 1.0)   # (WP, 2C)

        for x_ref, y_ref in ((x0_ref, y0_ref), (x1_ref, y1_ref)):
            x = x_ref[...].astype(jnp.float32)
            y = x * scale + shift
            y = (y * jax.nn.sigmoid(y)) * colmask
            y_ref[...] = y.astype(jnp.bfloat16)
        y0_ref[pl.ds(0, 1), :, :] = jnp.zeros((1, WP, C2), jnp.bfloat16)

        # ---- Pass 3: 3x3 stride-2 conv = 6 accumulated bf16 MXU dots. ------
        # Tap (kh, kw) reads parity (kh%2, kw%2) at offset (kh//2, kw//2).
        # Grouping kw=0,1 (same column offset, adjacent lane halves) gives one
        # K=2C dot per kh; kw=2 is one K=C dot per kh (lanes [0:C], col +1).
        acc = jnp.zeros((HO * WO, C), jnp.float32)
        for kh, (y_ref, dh) in enumerate(((y0_ref, 0), (y1_ref, 0), (y0_ref, 1))):
            pa = y_ref[pl.ds(dh, HO), pl.ds(0, WO), :]            # (HO, WO, 2C)
            acc = acc + jnp.dot(pa.reshape(HO * WO, C2), wa_ref[kh],
                                preferred_element_type=jnp.float32)
            pb = y_ref[pl.ds(dh, HO), pl.ds(1, WO), pl.ds(0, C)]  # (HO, WO, C)
            acc = acc + jnp.dot(pb.reshape(HO * WO, C), wb_ref[kh],
                                preferred_element_type=jnp.float32)
        o_ref[...] = (acc + bias_ref[...]).astype(o_ref.dtype)

    # Accurate scoped-VMEM request: double-buffered blocks + scratch + f32
    # temporary headroom + 2 MiB compiler slack.  (v5e default scoped VMEM is
    # only 16 MiB, so keep the request explicit.)
    act_blk = HP * WP * C2 * 2                                   # one bf16 input block
    params_bytes = (2 * C2 * 4 + 2 * C2 * groups * 4 + C * 4
                    + (3 * C2 * C + 3 * C * C) * 2)
    per_step = (2 * 2 * act_blk            # x0, x1 double-buffered
                + 2 * HO * WO * C * 4      # output block double-buffered
                + 2 * act_blk              # y0, y1 bf16 scratch
                + 2 * params_bytes         # constant param blocks
                + 3 * HP * WP * C2 * 4)    # f32 temporaries (upcast x, y, sums)
    vmem_limit = int(min(max(per_step + (2 << 20), 16 << 20), 64 << 20))

    return pl.pallas_call(
        kernel,
        out_shape=jax.ShapeDtypeStruct((N, HO * WO, C), dtype),
        grid_spec=pltpu.PrefetchScalarGridSpec(
            num_scalar_prefetch=0,
            grid=(N,),
            in_specs=[
                pl.BlockSpec((None, HP, WP, C2), lambda n: (n, 0, 0, 0)),   # x0
                pl.BlockSpec((None, HP, WP, C2), lambda n: (n, 0, 0, 0)),   # x1
                pl.BlockSpec((1, C2), lambda n: (0, 0)),                    # gamma (tiled x2)
                pl.BlockSpec((1, C2), lambda n: (0, 0)),                    # beta  (tiled x2)
                pl.BlockSpec((C2, groups), lambda n: (0, 0)),               # lane -> group
                pl.BlockSpec((groups, C2), lambda n: (0, 0)),               # group -> lane
                pl.BlockSpec((3, C2, C), lambda n: (0, 0, 0)),              # conv W, kw=0|1
                pl.BlockSpec((3, C, C), lambda n: (0, 0, 0)),               # conv W, kw=2
                pl.BlockSpec((1, C), lambda n: (0, 0)),                     # conv bias
            ],
            out_specs=pl.BlockSpec((None, HO * WO, C), lambda n: (n, 0, 0)),
            scratch_shapes=[pltpu.VMEM((HP, WP, C2), jnp.bfloat16)] * 2,
        ),
        compiler_params=pltpu.CompilerParams(
            dimension_semantics=("parallel",),
            vmem_limit_bytes=vmem_limit,
        ),
    )


# ---------------------------------------------------------------------------
# Wrapper: matches DownSample.forward(x, t) semantics (NCHW in, NCHW out).
# ---------------------------------------------------------------------------
def downsample_forward(x_nchw, t, gamma, beta, w_oihw, bias, *, groups=32, eps=1e-5):
    del t  # forward ignores t
    N, C, H, W = x_nchw.shape
    assert C % groups == 0, "GroupNorm requires C % groups == 0"
    assert H % 2 == 0 and W % 2 == 0, "even spatial dims expected"
    GS = C // groups
    HO, WO = H // 2, W // 2
    HP, WP = HO + 1, WO + 1
    dtype = x_nchw.dtype

    # NCHW -> NHWC, zero-pad by 1, split rows by parity and concatenate the two
    # column parities on the channel axis; cast to bf16 (halves HBM traffic).
    x = jnp.transpose(x_nchw, (0, 2, 3, 1))
    xp = jnp.pad(x, ((0, 0), (1, 1), (1, 1), (0, 0)))
    x0 = jnp.concatenate([xp[:, 0::2, 0::2, :], xp[:, 0::2, 1::2, :]],
                         axis=-1).astype(jnp.bfloat16)          # (N, HP, WP, 2C)
    x1 = jnp.concatenate([xp[:, 1::2, 0::2, :], xp[:, 1::2, 1::2, :]],
                         axis=-1).astype(jnp.bfloat16)          # (N, HP, WP, 2C)

    # Conv weights (O, I, kh, kw) -> per-kh stacked (2C, C) for kw=0|1 matching
    # the [colpar0 | colpar1] lane layout, and (C, C) for kw=2.  bf16 for MXU.
    wt = jnp.transpose(w_oihw, (2, 3, 1, 0))                     # (kh, kw, I, O)
    wa = jnp.stack([jnp.concatenate([wt[kh, 0], wt[kh, 1]], axis=0)
                    for kh in range(3)], axis=0).astype(jnp.bfloat16)   # (3, 2C, C)
    wb = wt[:, 2].astype(jnp.bfloat16)                                   # (3, C, C)

    # Per-channel affine params tiled to the 2C lane layout.
    gamma2 = jnp.concatenate([gamma, gamma]).reshape(1, 2 * C).astype(jnp.float32)
    beta2 = jnp.concatenate([beta, beta]).reshape(1, 2 * C).astype(jnp.float32)

    # Group reduce / broadcast matrices (hoisted out of the kernel).
    gid = (jnp.arange(2 * C) % C) // GS
    gmap = (gid[:, None] == jnp.arange(groups)[None, :]).astype(jnp.float32)  # (2C, G)
    gbc = gmap.T                                                              # (G, 2C)

    call = _downsample_fused_call(N, H, W, C, HP, WP, HO, WO, groups, float(eps), dtype)
    out = call(x0, x1, gamma2, beta2, gmap, gbc, wa, wb,
               bias.reshape(1, C).astype(jnp.float32))
    out = out.reshape(N, HO, WO, C)
    return jnp.transpose(out, (0, 3, 1, 2))   # back to NCHW


# ---------------------------------------------------------------------------
# Pure-JAX reference (NCHW, f32) for the correctness check.
# ---------------------------------------------------------------------------
def ref_forward(x, gamma, beta, w, b, *, groups=32, eps=1e-5):
    N, C, H, W = x.shape
    xg = x.reshape(N, groups, C // groups, H, W)
    mean = xg.mean(axis=(2, 3, 4), keepdims=True)
    var = xg.var(axis=(2, 3, 4), keepdims=True)
    xn = ((xg - mean) / jnp.sqrt(var + eps)).reshape(N, C, H, W)
    y = xn * gamma[None, :, None, None] + beta[None, :, None, None]
    y = y * jax.nn.sigmoid(y)
    out = jax.lax.conv_general_dilated(
        y, w, window_strides=(2, 2), padding=((1, 1), (1, 1)),
        dimension_numbers=("NCHW", "OIHW", "NCHW"))
    return out + b[None, :, None, None]


if __name__ == "__main__":
    key = jax.random.PRNGKey(0)
    N, C, H, W = 2, 64, 16, 16  # C must be divisible by 32 (GroupNorm(32, C))
    k1, k2, k3, k4, k5 = jax.random.split(key, 5)

    x = jax.random.normal(k1, (N, C, H, W), jnp.float32)
    t = jnp.zeros((N,), jnp.float32)  # unused time embedding, matches forward(x, t)

    # Deterministic synthetic parameters (shapes from the module __init__).
    gamma = 1.0 + 0.1 * jax.random.normal(k2, (C,), jnp.float32)   # norm1.weight
    beta = 0.1 * jax.random.normal(k3, (C,), jnp.float32)          # norm1.bias
    bound = 1.0 / math.sqrt(C * 3 * 3)
    w = jax.random.uniform(k4, (C, C, 3, 3), jnp.float32, -bound, bound)  # conv1.weight
    b = jax.random.uniform(k5, (C,), jnp.float32, -bound, bound)          # conv1.bias

    out = jax.jit(downsample_forward)(x, t, gamma, beta, w, b)
    out = jax.block_until_ready(out)
    assert out.shape == (N, C, H // 2, W // 2), out.shape

    ref = jax.block_until_ready(ref_forward(x, gamma, beta, w, b))
    err = float(jnp.max(jnp.abs(out - ref)))
    # bf16 inputs + bf16 conv operands (f32 accumulation) vs an all-f32 ref.
    if err > 2e-2:
        raise SystemExit(f"mismatch vs reference: max abs err = {err}")
    print("KERNEL_OK")
</pallas_src>

<mosaic_0001>
module attributes {stable_mosaic.version = 11 : i64} {
  func.func @kernel(%arg0: i32, %arg1: memref<1x9x9x128xbf16, #tpu.memory_space<vmem>>, %arg2: memref<1x9x9x128xbf16, #tpu.memory_space<vmem>>, %arg3: memref<1x128xf32, #tpu.memory_space<vmem>>, %arg4: memref<1x128xf32, #tpu.memory_space<vmem>>, %arg5: memref<128x32xf32, #tpu.memory_space<vmem>>, %arg6: memref<32x128xf32, #tpu.memory_space<vmem>>, %arg7: memref<3x128x64xbf16, #tpu.memory_space<vmem>>, %arg8: memref<3x64x64xbf16, #tpu.memory_space<vmem>>, %arg9: memref<1x64xf32, #tpu.memory_space<vmem>>, %arg10: memref<1x64x64xf32, #tpu.memory_space<vmem>>, %arg11: memref<9x9x128xbf16, #tpu.memory_space<vmem>>, %arg12: memref<9x9x128xbf16, #tpu.memory_space<vmem>>) attributes {dimension_semantics = [#tpu.dimension_semantics<parallel>], iteration_bounds = array<i64: 2>, scalar_prefetch = 0 : i64, scratch_operands = 2 : i64, tpu.core_type = #tpu.core_type<tc>, window_params = [{transform_indices = @transform_0, window_bounds = array<i64: 1, 9, 9, 128>}, {transform_indices = @transform_1, window_bounds = array<i64: 1, 9, 9, 128>}, {pipeline_mode = #tpu.pipeline_mode<synchronous>, transform_indices = @transform_2, window_bounds = array<i64: 1, 128>}, {pipeline_mode = #tpu.pipeline_mode<synchronous>, transform_indices = @transform_3, window_bounds = array<i64: 1, 128>}, {pipeline_mode = #tpu.pipeline_mode<synchronous>, transform_indices = @transform_4, window_bounds = array<i64: 128, 32>}, {pipeline_mode = #tpu.pipeline_mode<synchronous>, transform_indices = @transform_5, window_bounds = array<i64: 32, 128>}, {pipeline_mode = #tpu.pipeline_mode<synchronous>, transform_indices = @transform_6, window_bounds = array<i64: 3, 128, 64>}, {pipeline_mode = #tpu.pipeline_mode<synchronous>, transform_indices = @transform_7, window_bounds = array<i64: 3, 64, 64>}, {pipeline_mode = #tpu.pipeline_mode<synchronous>, transform_indices = @transform_8, window_bounds = array<i64: 1, 64>}, {transform_indices = @transform_9, window_bounds = array<i64: 1, 64, 64>}]} {
    %cst = arith.constant 0.000000e+00 : f32
    %0 = vector.broadcast %cst : f32 to vector<9x128xf32>
    %cst_0 = arith.constant 0.000000e+00 : f32
    %1 = vector.broadcast %cst_0 : f32 to vector<9x128xf32>
    %c0 = arith.constant 0 : index
    %c0_1 = arith.constant 0 : index
    %c0_2 = arith.constant 0 : index
    %c0_3 = arith.constant 0 : index
    %2 = vector.load %arg1[%c0, %c0_1, %c0_2, %c0_3] : memref<1x9x9x128xbf16, #tpu.memory_space<vmem>>, vector<1x9x9x128xbf16>
    %3 = vector.shape_cast %2 : vector<1x9x9x128xbf16> to vector<9x9x128xbf16>
    %4 = arith.extf %3 : vector<9x9x128xbf16> to vector<9x9x128xf32>
    %cst_4 = arith.constant dense<0.000000e+00> : vector<9x128xf32>
    %5 = vector.multi_reduction <add>, %4, %cst_4 [0] : vector<9x9x128xf32> to vector<9x128xf32>
    %6 = arith.addf %0, %5 : vector<9x128xf32>
    %7 = arith.mulf %4, %4 : vector<9x9x128xf32>
    %cst_5 = arith.constant dense<0.000000e+00> : vector<9x128xf32>
    %8 = vector.multi_reduction <add>, %7, %cst_5 [0] : vector<9x9x128xf32> to vector<9x128xf32>
    %9 = arith.addf %1, %8 : vector<9x128xf32>
    %c0_6 = arith.constant 0 : index
    %c0_7 = arith.constant 0 : index
    %c0_8 = arith.constant 0 : index
    %c0_9 = arith.constant 0 : index
    %10 = vector.load %arg2[%c0_6, %c0_7, %c0_8, %c0_9] : memref<1x9x9x128xbf16, #tpu.memory_space<vmem>>, vector<1x9x9x128xbf16>
    %11 = vector.shape_cast %10 : vector<1x9x9x128xbf16> to vector<9x9x128xbf16>
    %12 = arith.extf %11 : vector<9x9x128xbf16> to vector<9x9x128xf32>
    %cst_10 = arith.constant dense<0.000000e+00> : vector<9x128xf32>
    %13 = vector.multi_reduction <add>, %12, %cst_10 [0] : vector<9x9x128xf32> to vector<9x128xf32>
    %14 = arith.addf %6, %13 : vector<9x128xf32>
    %15 = arith.mulf %12, %12 : vector<9x9x128xf32>
    %cst_11 = arith.constant dense<0.000000e+00> : vector<9x128xf32>
    %16 = vector.multi_reduction <add>, %15, %cst_11 [0] : vector<9x9x128xf32> to vector<9x128xf32>
    %17 = arith.addf %9, %16 : vector<9x128xf32>
    %cst_12 = arith.constant dense<0.000000e+00> : vector<128xf32>
    %18 = vector.multi_reduction <add>, %14, %cst_12 [0] : vector<9x128xf32> to vector<128xf32>
    %19 = vector.shape_cast %18 : vector<128xf32> to vector<1x128xf32>
    %cst_13 = arith.constant dense<0.000000e+00> : vector<128xf32>
    %20 = vector.multi_reduction <add>, %17, %cst_13 [0] : vector<9x128xf32> to vector<128xf32>
    %21 = vector.shape_cast %20 : vector<128xf32> to vector<1x128xf32>
    %c0_14 = arith.constant 0 : index
    %c0_15 = arith.constant 0 : index
    %22 = vector.load %arg5[%c0_14, %c0_15] : memref<128x32xf32, #tpu.memory_space<vmem>>, vector<128x32xf32>
    %cst_16 = arith.constant dense<0.000000e+00> : vector<1x32xf32>
    %23 = tpu.matmul %19, %22, %cst_16 {dimension_numbers = #tpu.dot_dimension_numbers<[1], [0], [0], [1], [0, 0, 1, 1], [], []>} : vector<1x128xf32>, vector<128x32xf32>, vector<1x32xf32> -> vector<1x32xf32>
    %c0_17 = arith.constant 0 : index
    %c0_18 = arith.constant 0 : index
    %24 = vector.load %arg6[%c0_17, %c0_18] : memref<32x128xf32, #tpu.memory_space<vmem>>, vector<32x128xf32>
    %cst_19 = arith.constant dense<0.000000e+00> : vector<1x128xf32>
    %25 = tpu.matmul %23, %24, %cst_19 {dimension_numbers = #tpu.dot_dimension_numbers<[1], [0], [0], [1], [0, 0, 1, 1], [], []>} : vector<1x32xf32>, vector<32x128xf32>, vector<1x128xf32> -> vector<1x128xf32>
    %c0_20 = arith.constant 0 : index
    %c0_21 = arith.constant 0 : index
    %26 = vector.load %arg5[%c0_20, %c0_21] : memref<128x32xf32, #tpu.memory_space<vmem>>, vector<128x32xf32>
    %cst_22 = arith.constant dense<0.000000e+00> : vector<1x32xf32>
    %27 = tpu.matmul %21, %26, %cst_22 {dimension_numbers = #tpu.dot_dimension_numbers<[1], [0], [0], [1], [0, 0, 1, 1], [], []>} : vector<1x128xf32>, vector<128x32xf32>, vector<1x32xf32> -> vector<1x32xf32>
    %c0_23 = arith.constant 0 : index
    %c0_24 = arith.constant 0 : index
    %28 = vector.load %arg6[%c0_23, %c0_24] : memref<32x128xf32, #tpu.memory_space<vmem>>, vector<32x128xf32>
    %cst_25 = arith.constant dense<0.000000e+00> : vector<1x128xf32>
    %29 = tpu.matmul %27, %28, %cst_25 {dimension_numbers = #tpu.dot_dimension_numbers<[1], [0], [0], [1], [0, 0, 1, 1], [], []>} : vector<1x32xf32>, vector<32x128xf32>, vector<1x128xf32> -> vector<1x128xf32>
    %cst_26 = arith.constant 0.001953125 : f32
    %30 = vector.broadcast %cst_26 : f32 to vector<1x128xf32>
    %31 = arith.mulf %25, %30 : vector<1x128xf32>
    %cst_27 = arith.constant 0.001953125 : f32
    %32 = vector.broadcast %cst_27 : f32 to vector<1x128xf32>
    %33 = arith.mulf %29, %32 : vector<1x128xf32>
    %34 = arith.mulf %31, %31 : vector<1x128xf32>
    %35 = arith.subf %33, %34 : vector<1x128xf32>
    %cst_28 = arith.constant 0.000000e+00 : f32
    %36 = vector.broadcast %cst_28 : f32 to vector<1x128xf32>
    %37 = arith.maximumf %35, %36 : vector<1x128xf32>
    %cst_29 = arith.constant 9.99999974E-6 : f32
    %38 = vector.broadcast %cst_29 : f32 to vector<1x128xf32>
    %39 = arith.addf %37, %38 : vector<1x128xf32>
    %40 = math.rsqrt %39 : vector<1x128xf32>
    %c0_30 = arith.constant 0 : index
    %c0_31 = arith.constant 0 : index
    %41 = vector.load %arg3[%c0_30, %c0_31] : memref<1x128xf32, #tpu.memory_space<vmem>>, vector<1x128xf32>
    %42 = arith.mulf %40, %41 : vector<1x128xf32>
    %c0_32 = arith.constant 0 : index
    %c0_33 = arith.constant 0 : index
    %43 = vector.load %arg4[%c0_32, %c0_33] : memref<1x128xf32, #tpu.memory_space<vmem>>, vector<1x128xf32>
    %44 = arith.mulf %31, %42 : vector<1x128xf32>
    %45 = arith.subf %43, %44 : vector<1x128xf32>
    %46 = tpu.iota {dimensions = array<i32: 0>} : vector<9x128xi32>
    %47 = tpu.iota {dimensions = array<i32: 1>} : vector<9x128xi32>
    %c0_i32 = arith.constant 0 : i32
    %48 = vector.broadcast %c0_i32 : i32 to vector<9x128xi32>
    %49 = arith.cmpi eq, %46, %48 : vector<9x128xi32>
    %c64_i32 = arith.constant 64 : i32
    %50 = vector.broadcast %c64_i32 : i32 to vector<9x128xi32>
    %51 = arith.cmpi slt, %47, %50 : vector<9x128xi32>
    %52 = arith.andi %49, %51 : vector<9x128xi1>
    %cst_34 = arith.constant 0.000000e+00 : f32
    %cst_35 = arith.constant 1.000000e+00 : f32
    %53 = vector.broadcast %cst_34 : f32 to vector<9x128xf32>
    %54 = vector.broadcast %cst_35 : f32 to vector<9x128xf32>
    %55 = arith.select %52, %53, %54 : vector<9x128xi1>, vector<9x128xf32>
    %c0_36 = arith.constant 0 : index
    %c0_37 = arith.constant 0 : index
    %c0_38 = arith.constant 0 : index
    %c0_39 = arith.constant 0 : index
    %56 = vector.load %arg1[%c0_36, %c0_37, %c0_38, %c0_39] : memref<1x9x9x128xbf16, #tpu.memory_space<vmem>>, vector<1x9x9x128xbf16>
    %57 = vector.shape_cast %56 : vector<1x9x9x128xbf16> to vector<9x9x128xbf16>
    %58 = arith.extf %57 : vector<9x9x128xbf16> to vector<9x9x128xf32>
    %59 = vector.shape_cast %42 : vector<1x128xf32> to vector<1x1x128xf32>
    %60 = vector.broadcast %59 : vector<1x1x128xf32> to vector<9x9x128xf32>
    %61 = arith.mulf %58, %60 : vector<9x9x128xf32>
    %62 = vector.shape_cast %45 : vector<1x128xf32> to vector<1x1x128xf32>
    %63 = vector.broadcast %62 : vector<1x1x128xf32> to vector<9x9x128xf32>
    %64 = arith.addf %61, %63 : vector<9x9x128xf32>
    %65 = arith.negf %64 : vector<9x9x128xf32>
    %66 = math.exp %65 : vector<9x9x128xf32>
    %cst_40 = arith.constant 1.000000e+00 : f32
    %67 = vector.broadcast %cst_40 : f32 to vector<9x9x128xf32>
    %68 = arith.addf %67, %66 : vector<9x9x128xf32>
    %69 = arith.divf %67, %68 : vector<9x9x128xf32>
    %70 = arith.mulf %64, %69 : vector<9x9x128xf32>
    %71 = vector.shape_cast %55 : vector<9x128xf32> to vector<1x9x128xf32>
    %72 = vector.broadcast %71 : vector<1x9x128xf32> to vector<9x9x128xf32>
    %73 = arith.mulf %70, %72 : vector<9x9x128xf32>
    %74 = arith.truncf %73 : vector<9x9x128xf32> to vector<9x9x128xbf16>
    %c0_41 = arith.constant 0 : index
    %c0_42 = arith.constant 0 : index
    %c0_43 = arith.constant 0 : index
    %75 = vector.load %arg11[%c0_41, %c0_42, %c0_43] : memref<9x9x128xbf16, #tpu.memory_space<vmem>>, vector<9x9x128xbf16>
    tpu.vector_store %arg11[%c0_41, %c0_42, %c0_43], %74 {strides = array<i32>} : memref<9x9x128xbf16, #tpu.memory_space<vmem>>, vector<9x9x128xbf16>,
    %c0_44 = arith.constant 0 : index
    %c0_45 = arith.constant 0 : index
    %c0_46 = arith.constant 0 : index
    %c0_47 = arith.constant 0 : index
    %76 = vector.load %arg2[%c0_44, %c0_45, %c0_46, %c0_47] : memref<1x9x9x128xbf16, #tpu.memory_space<vmem>>, vector<1x9x9x128xbf16>
    %77 = vector.shape_cast %76 : vector<1x9x9x128xbf16> to vector<9x9x128xbf16>
    %78 = arith.extf %77 : vector<9x9x128xbf16> to vector<9x9x128xf32>
    %79 = vector.shape_cast %42 : vector<1x128xf32> to vector<1x1x128xf32>
    %80 = vector.broadcast %79 : vector<1x1x128xf32> to vector<9x9x128xf32>
    %81 = arith.mulf %78, %80 : vector<9x9x128xf32>
    %82 = vector.shape_cast %45 : vector<1x128xf32> to vector<1x1x128xf32>
    %83 = vector.broadcast %82 : vector<1x1x128xf32> to vector<9x9x128xf32>
    %84 = arith.addf %81, %83 : vector<9x9x128xf32>
    %85 = arith.negf %84 : vector<9x9x128xf32>
    %86 = math.exp %85 : vector<9x9x128xf32>
    %cst_48 = arith.constant 1.000000e+00 : f32
    %87 = vector.broadcast %cst_48 : f32 to vector<9x9x128xf32>
    %88 = arith.addf %87, %86 : vector<9x9x128xf32>
    %89 = arith.divf %87, %88 : vector<9x9x128xf32>
    %90 = arith.mulf %84, %89 : vector<9x9x128xf32>
    %91 = vector.shape_cast %55 : vector<9x128xf32> to vector<1x9x128xf32>
    %92 = vector.broadcast %91 : vector<1x9x128xf32> to vector<9x9x128xf32>
    %93 = arith.mulf %90, %92 : vector<9x9x128xf32>
    %94 = arith.truncf %93 : vector<9x9x128xf32> to vector<9x9x128xbf16>
    %c0_49 = arith.constant 0 : index
    %c0_50 = arith.constant 0 : index
    %c0_51 = arith.constant 0 : index
    %95 = vector.load %arg12[%c0_49, %c0_50, %c0_51] : memref<9x9x128xbf16, #tpu.memory_space<vmem>>, vector<9x9x128xbf16>
    tpu.vector_store %arg12[%c0_49, %c0_50, %c0_51], %94 {strides = array<i32>} : memref<9x9x128xbf16, #tpu.memory_space<vmem>>, vector<9x9x128xbf16>,
    %cst_52 = arith.constant 0.000000e+00 : bf16
    %96 = vector.broadcast %cst_52 : bf16 to vector<1x9x128xbf16>
    %c0_53 = arith.constant 0 : index
    %c0_54 = arith.constant 0 : index
    %c0_55 = arith.constant 0 : index
    %97 = vector.load %arg11[%c0_53, %c0_54, %c0_55] : memref<9x9x128xbf16, #tpu.memory_space<vmem>>, vector<1x9x128xbf16>
    tpu.vector_store %arg11[%c0_53, %c0_54, %c0_55], %96 {strides = array<i32>} : memref<9x9x128xbf16, #tpu.memory_space<vmem>>, vector<1x9x128xbf16>,
    %cst_56 = arith.constant 0.000000e+00 : f32
    %98 = vector.broadcast %cst_56 : f32 to vector<64x64xf32>
    %c0_57 = arith.constant 0 : index
    %c0_58 = arith.constant 0 : index
    %c0_59 = arith.constant 0 : index
    %99 = vector.load %arg11[%c0_57, %c0_58, %c0_59] : memref<9x9x128xbf16, #tpu.memory_space<vmem>>, vector<8x8x128xbf16>
    %100 = vector.shape_cast %99 : vector<8x8x128xbf16> to vector<64x128xbf16>
    %c0_60 = arith.constant 0 : index
    %c0_61 = arith.constant 0 : index
    %c0_62 = arith.constant 0 : index
    %101 = vector.load %arg7[%c0_60, %c0_61, %c0_62] : memref<3x128x64xbf16, #tpu.memory_space<vmem>>, vector<1x128x64xbf16>
    %102 = vector.shape_cast %101 : vector<1x128x64xbf16> to vector<128x64xbf16>
    %cst_63 = arith.constant dense<0.000000e+00> : vector<64x64xf32>
    %103 = tpu.matmul %100, %102, %cst_63 {dimension_numbers = #tpu.dot_dimension_numbers<[1], [0], [0], [1], [0, 0, 1, 1], [], []>} : vector<64x128xbf16>, vector<128x64xbf16>, vector<64x64xf32> -> vector<64x64xf32>
    %104 = arith.addf %98, %103 : vector<64x64xf32>
    %c0_64 = arith.constant 0 : index
    %c1 = arith.constant 1 : index
    %c0_65 = arith.constant 0 : index
    %105 = vector.load %arg11[%c0_64, %c1, %c0_65] : memref<9x9x128xbf16, #tpu.memory_space<vmem>>, vector<8x8x64xbf16>
    %106 = vector.shape_cast %105 : vector<8x8x64xbf16> to vector<64x64xbf16>
    %c0_66 = arith.constant 0 : index
    %c0_67 = arith.constant 0 : index
    %c0_68 = arith.constant 0 : index
    %107 = vector.load %arg8[%c0_66, %c0_67, %c0_68] : memref<3x64x64xbf16, #tpu.memory_space<vmem>>, vector<1x64x64xbf16>
    %108 = vector.shape_cast %107 : vector<1x64x64xbf16> to vector<64x64xbf16>
    %cst_69 = arith.constant dense<0.000000e+00> : vector<64x64xf32>
    %109 = tpu.matmul %106, %108, %cst_69 {dimension_numbers = #tpu.dot_dimension_numbers<[1], [0], [0], [1], [0, 0, 1, 1], [], []>} : vector<64x64xbf16>, vector<64x64xbf16>, vector<64x64xf32> -> vector<64x64xf32>
    %110 = arith.addf %104, %109 : vector<64x64xf32>
    %c0_70 = arith.constant 0 : index
    %c0_71 = arith.constant 0 : index
    %c0_72 = arith.constant 0 : index
    %111 = vector.load %arg12[%c0_70, %c0_71, %c0_72] : memref<9x9x128xbf16, #tpu.memory_space<vmem>>, vector<8x8x128xbf16>
    %112 = vector.shape_cast %111 : vector<8x8x128xbf16> to vector<64x128xbf16>
    %c1_73 = arith.constant 1 : index
    %c0_74 = arith.constant 0 : index
    %c0_75 = arith.constant 0 : index
    %113 = vector.load %arg7[%c1_73, %c0_74, %c0_75] : memref<3x128x64xbf16, #tpu.memory_space<vmem>>, vector<1x128x64xbf16>
    %114 = vector.shape_cast %113 : vector<1x128x64xbf16> to vector<128x64xbf16>
    %cst_76 = arith.constant dense<0.000000e+00> : vector<64x64xf32>
    %115 = tpu.matmul %112, %114, %cst_76 {dimension_numbers = #tpu.dot_dimension_numbers<[1], [0], [0], [1], [0, 0, 1, 1], [], []>} : vector<64x128xbf16>, vector<128x64xbf16>, vector<64x64xf32> -> vector<64x64xf32>
    %116 = arith.addf %110, %115 : vector<64x64xf32>
    %c0_77 = arith.constant 0 : index
    %c1_78 = arith.constant 1 : index
    %c0_79 = arith.constant 0 : index
    %117 = vector.load %arg12[%c0_77, %c1_78, %c0_79] : memref<9x9x128xbf16, #tpu.memory_space<vmem>>, vector<8x8x64xbf16>
    %118 = vector.shape_cast %117 : vector<8x8x64xbf16> to vector<64x64xbf16>
    %c1_80 = arith.constant 1 : index
    %c0_81 = arith.constant 0 : index
    %c0_82 = arith.constant 0 : index
    %119 = vector.load %arg8[%c1_80, %c0_81, %c0_82] : memref<3x64x64xbf16, #tpu.memory_space<vmem>>, vector<1x64x64xbf16>
    %120 = vector.shape_cast %119 : vector<1x64x64xbf16> to vector<64x64xbf16>
    %cst_83 = arith.constant dense<0.000000e+00> : vector<64x64xf32>
    %121 = tpu.matmul %118, %120, %cst_83 {dimension_numbers = #tpu.dot_dimension_numbers<[1], [0], [0], [1], [0, 0, 1, 1], [], []>} : vector<64x64xbf16>, vector<64x64xbf16>, vector<64x64xf32> -> vector<64x64xf32>
    %122 = arith.addf %116, %121 : vector<64x64xf32>
    %c1_84 = arith.constant 1 : index
    %c0_85 = arith.constant 0 : index
    %c0_86 = arith.constant 0 : index
    %123 = vector.load %arg11[%c1_84, %c0_85, %c0_86] : memref<9x9x128xbf16, #tpu.memory_space<vmem>>, vector<8x8x128xbf16>
    %124 = vector.shape_cast %123 : vector<8x8x128xbf16> to vector<64x128xbf16>
    %c2 = arith.constant 2 : index
    %c0_87 = arith.constant 0 : index
    %c0_88 = arith.constant 0 : index
    %125 = vector.load %arg7[%c2, %c0_87, %c0_88] : memref<3x128x64xbf16, #tpu.memory_space<vmem>>, vector<1x128x64xbf16>
    %126 = vector.shape_cast %125 : vector<1x128x64xbf16> to vector<128x64xbf16>
    %cst_89 = arith.constant dense<0.000000e+00> : vector<64x64xf32>
    %127 = tpu.matmul %124, %126, %cst_89 {dimension_numbers = #tpu.dot_dimension_numbers<[1], [0], [0], [1], [0, 0, 1, 1], [], []>} : vector<64x128xbf16>, vector<128x64xbf16>, vector<64x64xf32> -> vector<64x64xf32>
    %128 = arith.addf %122, %127 : vector<64x64xf32>
    %c1_90 = arith.constant 1 : index
    %c1_91 = arith.constant 1 : index
    %c0_92 = arith.constant 0 : index
    %129 = vector.load %arg11[%c1_90, %c1_91, %c0_92] : memref<9x9x128xbf16, #tpu.memory_space<vmem>>, vector<8x8x64xbf16>
    %130 = vector.shape_cast %129 : vector<8x8x64xbf16> to vector<64x64xbf16>
    %c2_93 = arith.constant 2 : index
    %c0_94 = arith.constant 0 : index
    %c0_95 = arith.constant 0 : index
    %131 = vector.load %arg8[%c2_93, %c0_94, %c0_95] : memref<3x64x64xbf16, #tpu.memory_space<vmem>>, vector<1x64x64xbf16>
    %132 = vector.shape_cast %131 : vector<1x64x64xbf16> to vector<64x64xbf16>
    %cst_96 = arith.constant dense<0.000000e+00> : vector<64x64xf32>
    %133 = tpu.matmul %130, %132, %cst_96 {dimension_numbers = #tpu.dot_dimension_numbers<[1], [0], [0], [1], [0, 0, 1, 1], [], []>} : vector<64x64xbf16>, vector<64x64xbf16>, vector<64x64xf32> -> vector<64x64xf32>
    %134 = arith.addf %128, %133 : vector<64x64xf32>
    %c0_97 = arith.constant 0 : index
    %c0_98 = arith.constant 0 : index
    %135 = vector.load %arg9[%c0_97, %c0_98] : memref<1x64xf32, #tpu.memory_space<vmem>>, vector<1x64xf32>
    %136 = vector.broadcast %135 : vector<1x64xf32> to vector<64x64xf32>
    %137 = arith.addf %134, %136 : vector<64x64xf32>
    %c0_99 = arith.constant 0 : index
    %c0_100 = arith.constant 0 : index
    %c0_101 = arith.constant 0 : index
    %138 = vector.load %arg10[%c0_99, %c0_100, %c0_101] : memref<1x64x64xf32, #tpu.memory_space<vmem>>, vector<1x64x64xf32>
    %139 = vector.shape_cast %138 : vector<1x64x64xf32> to vector<64x64xf32>
    %140 = vector.shape_cast %137 : vector<64x64xf32> to vector<1x64x64xf32>
    tpu.vector_store %arg10[%c0_99, %c0_100, %c0_101], %140 {strides = array<i32>} : memref<1x64x64xf32, #tpu.memory_space<vmem>>, vector<1x64x64xf32>,
    return
  }
  func.func @transform_0(%arg0: i32) -> (i32, i32, i32, i32) {
    %c0_i32 = arith.constant 0 : i32
    %c0_i32_0 = arith.constant 0 : i32
    %c0_i32_1 = arith.constant 0 : i32
    %c0_i32_2 = arith.constant 0 : i32
    return %arg0, %c0_i32, %c0_i32_0, %c0_i32_1 : i32, i32, i32, i32
  }
  func.func @transform_1(%arg0: i32) -> (i32, i32, i32, i32) {
    %c0_i32 = arith.constant 0 : i32
    %c0_i32_0 = arith.constant 0 : i32
    %c0_i32_1 = arith.constant 0 : i32
    %c0_i32_2 = arith.constant 0 : i32
    return %arg0, %c0_i32, %c0_i32_0, %c0_i32_1 : i32, i32, i32, i32
  }
  func.func @transform_2(%arg0: i32) -> (i32, i32) {
    %c0_i32 = arith.constant 0 : i32
    %c0_i32_0 = arith.constant 0 : i32
    %c0_i32_1 = arith.constant 0 : i32
    return %c0_i32, %c0_i32_0 : i32, i32
  }
  func.func @transform_3(%arg0: i32) -> (i32, i32) {
    %c0_i32 = arith.constant 0 : i32
    %c0_i32_0 = arith.constant 0 : i32
    %c0_i32_1 = arith.constant 0 : i32
    return %c0_i32, %c0_i32_0 : i32, i32
  }
  func.func @transform_4(%arg0: i32) -> (i32, i32) {
    %c0_i32 = arith.constant 0 : i32
    %c0_i32_0 = arith.constant 0 : i32
    %c0_i32_1 = arith.constant 0 : i32
    return %c0_i32, %c0_i32_0 : i32, i32
  }
  func.func @transform_5(%arg0: i32) -> (i32, i32) {
    %c0_i32 = arith.constant 0 : i32
    %c0_i32_0 = arith.constant 0 : i32
    %c0_i32_1 = arith.constant 0 : i32
    return %c0_i32, %c0_i32_0 : i32, i32
  }
  func.func @transform_6(%arg0: i32) -> (i32, i32, i32) {
    %c0_i32 = arith.constant 0 : i32
    %c0_i32_0 = arith.constant 0 : i32
    %c0_i32_1 = arith.constant 0 : i32
    %c0_i32_2 = arith.constant 0 : i32
    return %c0_i32, %c0_i32_0, %c0_i32_1 : i32, i32, i32
  }
  func.func @transform_7(%arg0: i32) -> (i32, i32, i32) {
    %c0_i32 = arith.constant 0 : i32
    %c0_i32_0 = arith.constant 0 : i32
    %c0_i32_1 = arith.constant 0 : i32
    %c0_i32_2 = arith.constant 0 : i32
    return %c0_i32, %c0_i32_0, %c0_i32_1 : i32, i32, i32
  }
  func.func @transform_8(%arg0: i32) -> (i32, i32) {
    %c0_i32 = arith.constant 0 : i32
    %c0_i32_0 = arith.constant 0 : i32
    %c0_i32_1 = arith.constant 0 : i32
    return %c0_i32, %c0_i32_0 : i32, i32
  }
  func.func @transform_9(%arg0: i32) -> (i32, i32, i32) {
    %c0_i32 = arith.constant 0 : i32
    %c0_i32_0 = arith.constant 0 : i32
    %c0_i32_1 = arith.constant 0 : i32
    return %arg0, %c0_i32, %c0_i32_0 : i32, i32, i32
  }
}

</mosaic_0001>

<llo_original>
// kernel: downsample_forward.1
$region0: #{downsample_forward.1}
  #allocation0 [shape = 'u32[]', space=smem, size = 0x4, offset = 0x4, fixed_abs, tag = 'smem constant byte address 0x4 - core index']
  #allocation1 [shape = 'u32[72,128]{1,0:T(1,128)}', space=vmem, size = 0x9000, scoped, tag = 'internal scratch']
  #allocation2 [shape = 'bf16[9,9,128]{2,1,0:T(8,128)(2,1)}', space=vmem, size = 0x9000, scoped, tag = 'scratch operand']
  #allocation3 [shape = 'bf16[9,9,128]{2,1,0:T(8,128)(2,1)}', space=vmem, size = 0x9000, scoped, tag = 'scratch operand']
  %s0 = inlined_call_operand.vmem [shape: bf16[2,9,9,128], index: 0, kind: input, shape index: {}]
  %s1 = inlined_call_operand.vmem [shape: bf16[2,9,9,128], index: 1, kind: input, shape index: {}]
  %s2 = inlined_call_operand.vmem [shape: f32[1,128], index: 2, kind: input, shape index: {}]
  %s3 = inlined_call_operand.vmem [shape: f32[1,128], index: 3, kind: input, shape index: {}]
  %s4 = inlined_call_operand.vmem [shape: f32[128,32], index: 4, kind: input, shape index: {}]
  %s5 = inlined_call_operand.vmem [shape: f32[32,128], index: 5, kind: input, shape index: {}]
  %s6 = inlined_call_operand.vmem [shape: bf16[3,128,64], index: 6, kind: input, shape index: {}]
  %s7 = inlined_call_operand.vmem [shape: bf16[3,64,64], index: 7, kind: input, shape index: {}]
  %s8 = inlined_call_operand.vmem [shape: f32[1,64], index: 8, kind: input, shape index: {}]
  %s9 = inlined_call_operand.hbm [shape: f32[2,64,64], index: 9, kind: output, shape index: {}]
  %s10 = sld [smem:[#allocation0]]
  $region69: #{downsample_forward.1} parent=0
    _
  %s12 = ssub.s32 1, %s10
  %s13 = scalar_select 0, %s12, %s10
  $region1: #{downsample_forward.1} parent=0
    #allocation4 [shape = 'u8[65536]{0}', space=vmem, size = 0x10000, scoped, tag = 'output window, operand 0']
    #allocation5 [shape = 's32[2]{0}', space=sflag, size = 0x8, scoped, tag = 'scoped memory for downsample_forward.1']
    %14 = vsyncpa [#allocation5], 0
    %s15 = scalar_lea.sflag [#allocation5], 1
    %16 = vsyncpa %s15, 0
    loop: start=0, step=1, limit=4
    $region2: #{downsample_forward.1} parent=1 // loop_pre_header
      _
    $region3: #{downsample_forward.1} parent=1 // loop_header
      %s18 = sphi 0, %s22
      %p19 = scmp.ge.s32.totalorder %s18, 4
      %s28 = sphi 0, %s30
      %s31 = sphi 0, %s28
      %s32 = sphi 0, %s31
      %s48 = sphi 0, %s32
      %s54 = sphi 0, %s56
      %s57 = sphi 0, %s54
      %s58 = sphi 0, %s57
      %s74 = sphi 0, %s58
      %s78 = sphi 0, %s78
      %s80 = sphi 0, %s78
      %s81 = sphi 0, %s80
      %s95 = sphi 0, %s81
      %s99 = sphi 0, %s99
      %s101 = sphi 0, %s99
      %s102 = sphi 0, %s101
      %s116 = sphi 0, %s102
      %s120 = sphi 0, %s120
      %s122 = sphi 0, %s120
      %s123 = sphi 0, %s122
      %s137 = sphi 0, %s123
      %s141 = sphi 0, %s141
      %s143 = sphi 0, %s141
      %s144 = sphi 0, %s143
      %s158 = sphi 0, %s144
      %s162 = sphi 0, %s162
      %s164 = sphi 0, %s162
      %s165 = sphi 0, %s164
      %s179 = sphi 0, %s165
      %s183 = sphi 0, %s183
      %s185 = sphi 0, %s183
      %s186 = sphi 0, %s185
      %s200 = sphi 0, %s186
      %s204 = sphi 0, %s204
      %s206 = sphi 0, %s204
      %s207 = sphi 0, %s206
      %s221 = sphi 0, %s207
      %s227 = sphi 0, %s229
      %s230 = sphi 0, %s227
      %s231 = sphi 0, %s230
      %s247 = sphi 0, %s231
    $region4: #{downsample_forward.1} parent=1 // loop_header_branch
      %21 = sbr.rel (%p19) target = $region8
    $region5: #{downsample_forward.1} parent=1 // loop_body
      %s23 = ssub.s32 %s18, 1
      %s24 = ssub.s32 %s18, 2
      %s25 = sadd.s32 %s18, 1
      %s26 = ssub.s32 %s18, %s25
      %p27 = scmp.eq.s32.totalorder %s26, 0
      %s29 = sadd.s32 %s28, 1
      %s30 = scalar_select %p27, %s28, %s29
      %p33 = pneg %p27
      %p34 = scmp.eq.s32.totalorder %s18, 1
      %p35 = por %p33, %p34
      %p36 = scmp.ne.s32.totalorder %s28, %s31
      %p37 = scmp.eq.s32.totalorder %s18, 0
      %p38 = por %p36, %p37
      %p39 = scmp.ne.s32.totalorder %s28, %s31
      %p40 = scmp.eq.s32.totalorder %s23, 1
      %p41 = por %p39, %p40
      %p42 = scmp.ne.s32.totalorder %s31, %s32
      %p43 = scmp.eq.s32.totalorder %s23, 0
      %p44 = por %p42, %p43
      %p45 = scmp.ne.s32.totalorder %s31, %s32
      %p46 = scmp.eq.s32.totalorder %s24, 1
      %p47 = por %p45, %p46
      %p49 = scmp.ne.s32.totalorder %s32, %s48
      %p50 = scmp.eq.s32.totalorder %s24, 0
      %p51 = por %p49, %p50
      %s52 = ssub.s32 %s18, %s25
      %p53 = scmp.eq.s32.totalorder %s52, 0
      %s55 = sadd.s32 %s54, 1
      %s56 = scalar_select %p53, %s54, %s55
      %p59 = pneg %p53
      %p60 = scmp.eq.s32.totalorder %s18, 1
      %p61 = por %p59, %p60
      %p62 = scmp.ne.s32.totalorder %s54, %s57
      %p63 = scmp.eq.s32.totalorder %s18, 0
      %p64 = por %p62, %p63
      %p65 = scmp.ne.s32.totalorder %s54, %s57
      %p66 = scmp.eq.s32.totalorder %s23, 1
      %p67 = por %p65, %p66
      %p68 = scmp.ne.s32.totalorder %s57, %s58
      %p69 = scmp.eq.s32.totalorder %s23, 0
      %p70 = por %p68, %p69
      %p71 = scmp.ne.s32.totalorder %s57, %s58
      %p72 = scmp.eq.s32.totalorder %s24, 1
      %p73 = por %p71, %p72
      %p75 = scmp.ne.s32.totalorder %s58, %s74
      %p76 = scmp.eq.s32.totalorder %s24, 0
      %p77 = por %p75, %p76
      %s79 = sadd.s32 %s78, 1
      %p82 = scmp.eq.s32.totalorder %s18, 1
      %p83 = scmp.ne.s32.totalorder %s78, %s80
      %p84 = scmp.eq.s32.totalorder %s18, 0
      %p85 = por %p83, %p84
      %p86 = scmp.ne.s32.totalorder %s78, %s80
      %p87 = scmp.eq.s32.totalorder %s23, 1
      %p88 = por %p86, %p87
      %p89 = scmp.ne.s32.totalorder %s80, %s81
      %p90 = scmp.eq.s32.totalorder %s23, 0
      %p91 = por %p89, %p90
      %p92 = scmp.ne.s32.totalorder %s80, %s81
      %p93 = scmp.eq.s32.totalorder %s24, 1
      %p94 = por %p92, %p93
      %p96 = scmp.ne.s32.totalorder %s81, %s95
      %p97 = scmp.eq.s32.totalorder %s24, 0
      %p98 = por %p96, %p97
      %s100 = sadd.s32 %s99, 1
      %p103 = scmp.eq.s32.totalorder %s18, 1
      %p104 = scmp.ne.s32.totalorder %s99, %s101
      %p105 = scmp.eq.s32.totalorder %s18, 0
      %p106 = por %p104, %p105
      %p107 = scmp.ne.s32.totalorder %s99, %s101
      %p108 = scmp.eq.s32.totalorder %s23, 1
      %p109 = por %p107, %p108
      %p110 = scmp.ne.s32.totalorder %s101, %s102
      %p111 = scmp.eq.s32.totalorder %s23, 0
      %p112 = por %p110, %p111
      %p113 = scmp.ne.s32.totalorder %s101, %s102
      %p114 = scmp.eq.s32.totalorder %s24, 1
      %p115 = por %p113, %p114
      %p117 = scmp.ne.s32.totalorder %s102, %s116
      %p118 = scmp.eq.s32.totalorder %s24, 0
      %p119 = por %p117, %p118
      %s121 = sadd.s32 %s120, 1
      %p124 = scmp.eq.s32.totalorder %s18, 1
      %p125 = scmp.ne.s32.totalorder %s120, %s122
      %p126 = scmp.eq.s32.totalorder %s18, 0
      %p127 = por %p125, %p126
      %p128 = scmp.ne.s32.totalorder %s120, %s122
      %p129 = scmp.eq.s32.totalorder %s23, 1
      %p130 = por %p128, %p129
      %p131 = scmp.ne.s32.totalorder %s122, %s123
      %p132 = scmp.eq.s32.totalorder %s23, 0
      %p133 = por %p131, %p132
      %p134 = scmp.ne.s32.totalorder %s122, %s123
      %p135 = scmp.eq.s32.totalorder %s24, 1
      %p136 = por %p134, %p135
      %p138 = scmp.ne.s32.totalorder %s123, %s137
      %p139 = scmp.eq.s32.totalorder %s24, 0
      %p140 = por %p138, %p139
      %s142 = sadd.s32 %s141, 1
      %p145 = scmp.eq.s32.totalorder %s18, 1
      %p146 = scmp.ne.s32.totalorder %s141, %s143
      %p147 = scmp.eq.s32.totalorder %s18, 0
      %p148 = por %p146, %p147
      %p149 = scmp.ne.s32.totalorder %s141, %s143
      %p150 = scmp.eq.s32.totalorder %s23, 1
      %p151 = por %p149, %p150
      %p152 = scmp.ne.s32.totalorder %s143, %s144
      %p153 = scmp.eq.s32.totalorder %s23, 0
      %p154 = por %p152, %p153
      %p155 = scmp.ne.s32.totalorder %s143, %s144
      %p156 = scmp.eq.s32.totalorder %s24, 1
      %p157 = por %p155, %p156
      %p159 = scmp.ne.s32.totalorder %s144, %s158
      %p160 = scmp.eq.s32.totalorder %s24, 0
      %p161 = por %p159, %p160
      %s163 = sadd.s32 %s162, 1
      %p166 = scmp.eq.s32.totalorder %s18, 1
      %p167 = scmp.ne.s32.totalorder %s162, %s164
      %p168 = scmp.eq.s32.totalorder %s18, 0
      %p169 = por %p167, %p168
      %p170 = scmp.ne.s32.totalorder %s162, %s164
      %p171 = scmp.eq.s32.totalorder %s23, 1
      %p172 = por %p170, %p171
      %p173 = scmp.ne.s32.totalorder %s164, %s165
      %p174 = scmp.eq.s32.totalorder %s23, 0
      %p175 = por %p173, %p174
      %p176 = scmp.ne.s32.totalorder %s164, %s165
      %p177 = scmp.eq.s32.totalorder %s24, 1
      %p178 = por %p176, %p177
      %p180 = scmp.ne.s32.totalorder %s165, %s179
      %p181 = scmp.eq.s32.totalorder %s24, 0
      %p182 = por %p180, %p181
      %s184 = sadd.s32 %s183, 1
      %p187 = scmp.eq.s32.totalorder %s18, 1
      %p188 = scmp.ne.s32.totalorder %s183, %s185
      %p189 = scmp.eq.s32.totalorder %s18, 0
      %p190 = por %p188, %p189
      %p191 = scmp.ne.s32.totalorder %s183, %s185
      %p192 = scmp.eq.s32.totalorder %s23, 1
      %p193 = por %p191, %p192
      %p194 = scmp.ne.s32.totalorder %s185, %s186
      %p195 = scmp.eq.s32.totalorder %s23, 0
      %p196 = por %p194, %p195
      %p197 = scmp.ne.s32.totalorder %s185, %s186
      %p198 = scmp.eq.s32.totalorder %s24, 1
      %p199 = por %p197, %p198
      %p201 = scmp.ne.s32.totalorder %s186, %s200
      %p202 = scmp.eq.s32.totalorder %s24, 0
      %p203 = por %p201, %p202
      %s205 = sadd.s32 %s204, 1
      %p208 = scmp.eq.s32.totalorder %s18, 1
      %p209 = scmp.ne.s32.totalorder %s204, %s206
      %p210 = scmp.eq.s32.totalorder %s18, 0
      %p211 = por %p209, %p210
      %p212 = scmp.ne.s32.totalorder %s204, %s206
      %p213 = scmp.eq.s32.totalorder %s23, 1
      %p214 = por %p212, %p213
      %p215 = scmp.ne.s32.totalorder %s206, %s207
      %p216 = scmp.eq.s32.totalorder %s23, 0
      %p217 = por %p215, %p216
      %p218 = scmp.ne.s32.totalorder %s206, %s207
      %p219 = scmp.eq.s32.totalorder %s24, 1
      %p220 = por %p218, %p219
      %p222 = scmp.ne.s32.totalorder %s207, %s221
      %p223 = scmp.eq.s32.totalorder %s24, 0
      %p224 = por %p222, %p223
      %s225 = ssub.s32 %s18, %s25
      %p226 = scmp.eq.s32.totalorder %s225, 0
      %s228 = sadd.s32 %s227, 1
      %s229 = scalar_select %p226, %s227, %s228
      %p232 = pneg %p226
      %p233 = scmp.eq.s32.totalorder %s18, 1
      %p234 = por %p232, %p233
      %p235 = scmp.ne.s32.totalorder %s227, %s230
      %p236 = scmp.eq.s32.totalorder %s18, 0
      %p237 = por %p235, %p236
      %p238 = scmp.ne.s32.totalorder %s227, %s230
      %p239 = scmp.eq.s32.totalorder %s23, 1
      %p240 = por %p238, %p239
      %p241 = scmp.ne.s32.totalorder %s230, %s231
      %p242 = scmp.eq.s32.totalorder %s23, 0
      %p243 = por %p241, %p242
      %p244 = scmp.ne.s32.totalorder %s230, %s231
      %p245 = scmp.eq.s32.totalorder %s24, 1
      %p246 = por %p244, %p245
      %p248 = scmp.ne.s32.totalorder %s231, %s247
      %p249 = scmp.eq.s32.totalorder %s24, 0
      %p250 = por %p248, %p249
      %p251 = scmp.le.s32.totalorder 1, %s18
      %p252 = scmp.lt.s32.totalorder %s18, 3
      %p253 = pnand %p251, %p252
      %p254 = pneg %p253
      // Predicated region
      $region9: #{downsample_forward.1} parent=5 // pred_check
        _
      $region10: #{downsample_forward.1} parent=5 // pred_check_branch
        %256 = sbr.rel (%p253) target = $region12
      $region11: #{downsample_forward.1} parent=5 // pred_region
        %s257 = ssub.s32 %s18, 1
        // Predicated region
        $region13: #{downsample_forward.1} parent=11 // pred_check
          %p258 = pneg %p91
        $region14: #{downsample_forward.1} parent=11 // pred_check_branch
          %260 = sbr.rel (%p258) target = $region16
        $region15: #{downsample_forward.1} parent=11 // pred_region
          _
        $region16: #{downsample_forward.1} parent=11 // pred_fallthru
          _
        // Predicated region
        $region17: #{downsample_forward.1} parent=11 // pred_check
          %p261 = pneg %p112
        $region18: #{downsample_forward.1} parent=11 // pred_check_branch
          %263 = sbr.rel (%p261) target = $region20
        $region19: #{downsample_forward.1} parent=11 // pred_region
          _
        $region20: #{downsample_forward.1} parent=11 // pred_fallthru
          _
        // Predicated region
        $region21: #{downsample_forward.1} parent=11 // pred_check
          %p264 = pneg %p133
        $region22: #{downsample_forward.1} parent=11 // pred_check_branch
          %266 = sbr.rel (%p264) target = $region24
        $region23: #{downsample_forward.1} parent=11 // pred_region
          _
        $region24: #{downsample_forward.1} parent=11 // pred_fallthru
          _
        // Predicated region
        $region25: #{downsample_forward.1} parent=11 // pred_check
          %p267 = pneg %p154
        $region26: #{downsample_forward.1} parent=11 // pred_check_branch
          %269 = sbr.rel (%p267) target = $region28
        $region27: #{downsample_forward.1} parent=11 // pred_region
          _
        $region28: #{downsample_forward.1} parent=11 // pred_fallthru
          _
        // Predicated region
        $region29: #{downsample_forward.1} parent=11 // pred_check
          %p270 = pneg %p175
        $region30: #{downsample_forward.1} parent=11 // pred_check_branch
          %272 = sbr.rel (%p270) target = $region32
        $region31: #{downsample_forward.1} parent=11 // pred_region
          _
        $region32: #{downsample_forward.1} parent=11 // pred_fallthru
          _
        // Predicated region
        $region33: #{downsample_forward.1} parent=11 // pred_check
          %p273 = pneg %p196
        $region34: #{downsample_forward.1} parent=11 // pred_check_branch
          %275 = sbr.rel (%p273) target = $region36
        $region35: #{downsample_forward.1} parent=11 // pred_region
          _
        $region36: #{downsample_forward.1} parent=11 // pred_fallthru
          _
        // Predicated region
        $region37: #{downsample_forward.1} parent=11 // pred_check
          %p276 = pneg %p217
        $region38: #{downsample_forward.1} parent=11 // pred_check_branch
          %278 = sbr.rel (%p276) target = $region40
        $region39: #{downsample_forward.1} parent=11 // pred_region
          _
        $region40: #{downsample_forward.1} parent=11 // pred_fallthru
          _
      $region12: #{downsample_forward.1} parent=5 // pred_fallthru
        _
      %p279 = scmp.lt.s32.totalorder %s18, 2
      // Predicated region
      $region41: #{downsample_forward.1} parent=5 // pred_check
        %p280 = pneg %p279
      $region42: #{downsample_forward.1} parent=5 // pred_check_branch
        %282 = sbr.rel (%p280) target = $region44
      $region43: #{downsample_forward.1} parent=5 // pred_region
        // Predicated region
        $region45: #{downsample_forward.1} parent=43 // pred_check
          %p283 = pneg %p38
        $region46: #{downsample_forward.1} parent=43 // pred_check_branch
          %285 = sbr.rel (%p283) target = $region48
        $region47: #{downsample_forward.1} parent=43 // pred_region
          %p286 = scmp.lt.s32.totalorder %s18, 1
          %s287 = scalar_select %p286, %s18, 1
          %s288 = smul.addr %s287, 18
          %s289 = smul.addr %s288, 4
          %s290 = scalar_lea.vmem %s0, %s289
        $region48: #{downsample_forward.1} parent=43 // pred_fallthru
          _
        // Predicated region
        $region49: #{downsample_forward.1} parent=43 // pred_check
          %p291 = pneg %p64
        $region50: #{downsample_forward.1} parent=43 // pred_check_branch
          %293 = sbr.rel (%p291) target = $region52
        $region51: #{downsample_forward.1} parent=43 // pred_region
          %p294 = scmp.lt.s32.totalorder %s18, 1
          %s295 = scalar_select %p294, %s18, 1
          %s296 = smul.addr %s295, 18
          %s297 = smul.addr %s296, 4
          %s298 = scalar_lea.vmem %s1, %s297
        $region52: #{downsample_forward.1} parent=43 // pred_fallthru
          _
      $region44: #{downsample_forward.1} parent=5 // pred_fallthru
        _
      %p299 = scmp.le.s32.totalorder 1, %s18
      %p300 = scmp.lt.s32.totalorder %s18, 3
      %p301 = pnand %p299, %p300
      %p302 = pneg %p301
      // Predicated region
      $region53: #{downsample_forward.1} parent=5 // pred_check
        _
      $region54: #{downsample_forward.1} parent=5 // pred_check_branch
        %304 = sbr.rel (%p301) target = $region56
      $region55: #{downsample_forward.1} parent=5 // pred_region
        %s305 = ssub.s32 %s18, 1
        %p306 = scmp.lt.s32.totalorder %s23, 1
        %s307 = scalar_select %p306, %s23, 1
        %s308 = smul.addr %s307, 18
        %s309 = smul.addr %s308, 4
        %s310 = scalar_lea.vmem %s0, %s309
        %p311 = pneg %p44
        %p312 = pneg %p41
        %p313 = scmp.lt.s32.totalorder %s23, 1
        %s314 = scalar_select %p313, %s23, 1
        %s315 = smul.addr %s314, 18
        %s316 = smul.addr %s315, 4
        %s317 = scalar_lea.vmem %s1, %s316
        %p318 = pneg %p70
        %p319 = pneg %p67
        %p320 = pneg %p91
        %p321 = pneg %p88
        %p322 = pneg %p112
        %p323 = pneg %p109
        %p324 = pneg %p133
        %p325 = pneg %p130
        %p326 = pneg %p154
        %p327 = pneg %p151
        %p328 = pneg %p175
        %p329 = pneg %p172
        %p330 = pneg %p196
        %p331 = pneg %p193
        %p332 = pneg %p217
        %p333 = pneg %p214
        %p334 = pneg %p243
        %p335 = pneg %p240
        %s336 = sand.u32 %s230, 1
        %s337 = scalar_lea.sflag [#allocation5], %s336
        %s338 = sand.u32 %s230, 1
        %s339 = smul.addr %s338, 64
        %s340 = scalar_lea.vmem [#allocation4], %s339
        %p341 = scmp.lt.s32.totalorder %s23, 1
        %s342 = scalar_select %p341, %s23, 1
        %s343 = smul.addr %s342, 18
        %s344 = smul.addr %s343, 4
        %s345 = scalar_lea.vmem %s0, %s344
        %p346 = scmp.lt.s32.totalorder %s23, 1
        %s347 = scalar_select %p346, %s23, 1
        %s348 = smul.addr %s347, 18
        %s349 = smul.addr %s348, 4
        %s350 = scalar_lea.vmem %s1, %s349
        %v352 = vld [vmem:[%s345] sm:$0xf]
        %v353 = vld [vmem:[%s345 + $0x4] sm:$0x1]
        %v354 = vld [vmem:[%s345 + $0x8] sm:$0xf]
        %v355 = vld [vmem:[%s345 + $0xc] sm:$0x1]
        %v356 = vld [vmem:[%s345 + $0x10] sm:$0xf]
        %v357 = vld [vmem:[%s345 + $0x14] sm:$0x1]
        %v358 = vld [vmem:[%s345 + $0x18] sm:$0xf]
        %v359 = vld [vmem:[%s345 + $0x1c] sm:$0x1]
        %v360 = vld [vmem:[%s345 + $0x20] sm:$0xf]
        %v361 = vld [vmem:[%s345 + $0x24] sm:$0x1]
        %v362 = vld [vmem:[%s345 + $0x28] sm:$0xf]
        %v363 = vld [vmem:[%s345 + $0x2c] sm:$0x1]
        %v364 = vld [vmem:[%s345 + $0x30] sm:$0xf]
        %v365 = vld [vmem:[%s345 + $0x34] sm:$0x1]
        %v366 = vld [vmem:[%s345 + $0x38] sm:$0xf]
        %v367 = vld [vmem:[%s345 + $0x3c] sm:$0x1]
        %v368 = vld [vmem:[%s345 + $0x40] sm:$0xf]
        %v369 = vld [vmem:[%s345 + $0x44] sm:$0x1]
        %v370 = vunpack.c.l.bf16 %v352
        %v371 = vunpack.c.l.bf16 %v353
        %v372 = vunpack.c.l.bf16 %v354
        %v373 = vunpack.c.l.bf16 %v355
        %v374 = vunpack.c.l.bf16 %v356
        %v375 = vunpack.c.l.bf16 %v357
        %v376 = vunpack.c.l.bf16 %v358
        %v377 = vunpack.c.l.bf16 %v359
        %v378 = vunpack.c.l.bf16 %v360
        %v379 = vunpack.c.l.bf16 %v361
        %v380 = vunpack.c.l.bf16 %v362
        %v381 = vunpack.c.l.bf16 %v363
        %v382 = vunpack.c.l.bf16 %v364
        %v383 = vunpack.c.l.bf16 %v365
        %v384 = vunpack.c.l.bf16 %v366
        %v385 = vunpack.c.l.bf16 %v367
        %v386 = vunpack.c.l.bf16 %v368
        %v387 = vunpack.c.l.bf16 %v369
        %v388 = vadd.f32 %v370, %v372
        %v389 = vadd.f32 %v388, %v374
        %v390 = vadd.f32 %v389, %v376
        %v391 = vadd.f32 %v390, %v378
        %v392 = vadd.f32 %v391, %v380
        %v393 = vadd.f32 %v392, %v382
        %v394 = vadd.f32 %v393, %v384
        %v395 = vadd.f32 %v394, %v386
        %vm396 = vcmask 1040384
        %v397 = vsel %vm396, %v371, 0.0
        %v398 = vsel %vm396, %v373, 0.0
        %v399 = vadd.f32 %v397, %v398
        %v400 = vsel %vm396, %v375, 0.0
        %v401 = vadd.f32 %v399, %v400
        %v402 = vsel %vm396, %v377, 0.0
        %v403 = vadd.f32 %v401, %v402
        %v404 = vsel %vm396, %v379, 0.0
        %v405 = vadd.f32 %v403, %v404
        %v406 = vsel %vm396, %v381, 0.0
        %v407 = vadd.f32 %v405, %v406
        %v408 = vsel %vm396, %v383, 0.0
        %v409 = vadd.f32 %v407, %v408
        %v410 = vsel %vm396, %v385, 0.0
        %v411 = vadd.f32 %v409, %v410
        %v412 = vsel %vm396, %v387, 0.0
        %v413 = vadd.f32 %v411, %v412
        %v414 = vadd.f32 %v395, 0.0
        %v415 = vadd.f32 %v413, 0.0
        %v416 = vmul.f32 %v370, %v370
        %v417 = vmul.f32 %v371, %v371
        %v418 = vmul.f32 %v372, %v372
        %v419 = vmul.f32 %v373, %v373
        %v420 = vmul.f32 %v374, %v374
        %v421 = vmul.f32 %v375, %v375
        %v422 = vmul.f32 %v376, %v376
        %v423 = vmul.f32 %v377, %v377
        %v424 = vmul.f32 %v378, %v378
        %v425 = vmul.f32 %v379, %v379
        %v426 = vmul.f32 %v380, %v380
        %v427 = vmul.f32 %v381, %v381
        %v428 = vmul.f32 %v382, %v382
        %v429 = vmul.f32 %v383, %v383
        %v430 = vmul.f32 %v384, %v384
        %v431 = vmul.f32 %v385, %v385
        %v432 = vmul.f32 %v386, %v386
        %v433 = vmul.f32 %v387, %v387
        %v434 = vadd.f32 %v416, %v418
        %v435 = vadd.f32 %v434, %v420
        %v436 = vadd.f32 %v435, %v422
        %v437 = vadd.f32 %v436, %v424
        %v438 = vadd.f32 %v437, %v426
        %v439 = vadd.f32 %v438, %v428
        %v440 = vadd.f32 %v439, %v430
        %v441 = vadd.f32 %v440, %v432
        %v442 = vsel %vm396, %v417, 0.0
        %v443 = vsel %vm396, %v419, 0.0
        %v444 = vadd.f32 %v442, %v443
        %v445 = vsel %vm396, %v421, 0.0
        %v446 = vadd.f32 %v444, %v445
        %v447 = vsel %vm396, %v423, 0.0
        %v448 = vadd.f32 %v446, %v447
        %v449 = vsel %vm396, %v425, 0.0
        %v450 = vadd.f32 %v448, %v449
        %v451 = vsel %vm396, %v427, 0.0
        %v452 = vadd.f32 %v450, %v451
        %v453 = vsel %vm396, %v429, 0.0
        %v454 = vadd.f32 %v452, %v453
        %v455 = vsel %vm396, %v431, 0.0
        %v456 = vadd.f32 %v454, %v455
        %v457 = vsel %vm396, %v433, 0.0
        %v458 = vadd.f32 %v456, %v457
        %v459 = vadd.f32 %v441, 0.0
        %v460 = vadd.f32 %v458, 0.0
        %v461 = vld [vmem:[%s350] sm:$0xf]
        %v462 = vld [vmem:[%s350 + $0x4] sm:$0x1]
        %v463 = vld [vmem:[%s350 + $0x8] sm:$0xf]
        %v464 = vld [vmem:[%s350 + $0xc] sm:$0x1]
        %v465 = vld [vmem:[%s350 + $0x10] sm:$0xf]
        %v466 = vld [vmem:[%s350 + $0x14] sm:$0x1]
        %v467 = vld [vmem:[%s350 + $0x18] sm:$0xf]
        %v468 = vld [vmem:[%s350 + $0x1c] sm:$0x1]
        %v469 = vld [vmem:[%s350 + $0x20] sm:$0xf]
        %v470 = vld [vmem:[%s350 + $0x24] sm:$0x1]
        %v471 = vld [vmem:[%s350 + $0x28] sm:$0xf]
        %v472 = vld [vmem:[%s350 + $0x2c] sm:$0x1]
        %v473 = vld [vmem:[%s350 + $0x30] sm:$0xf]
        %v474 = vld [vmem:[%s350 + $0x34] sm:$0x1]
        %v475 = vld [vmem:[%s350 + $0x38] sm:$0xf]
        %v476 = vld [vmem:[%s350 + $0x3c] sm:$0x1]
        %v477 = vld [vmem:[%s350 + $0x40] sm:$0xf]
        %v478 = vld [vmem:[%s350 + $0x44] sm:$0x1]
        %v479 = vunpack.c.l.bf16 %v461
        %v480 = vunpack.c.l.bf16 %v462
        %v481 = vunpack.c.l.bf16 %v463
        %v482 = vunpack.c.l.bf16 %v464
        %v483 = vunpack.c.l.bf16 %v465
        %v484 = vunpack.c.l.bf16 %v466
        %v485 = vunpack.c.l.bf16 %v467
        %v486 = vunpack.c.l.bf16 %v468
        %v487 = vunpack.c.l.bf16 %v469
        %v488 = vunpack.c.l.bf16 %v470
        %v489 = vunpack.c.l.bf16 %v471
        %v490 = vunpack.c.l.bf16 %v472
        %v491 = vunpack.c.l.bf16 %v473
        %v492 = vunpack.c.l.bf16 %v474
        %v493 = vunpack.c.l.bf16 %v475
        %v494 = vunpack.c.l.bf16 %v476
        %v495 = vunpack.c.l.bf16 %v477
        %v496 = vunpack.c.l.bf16 %v478
        %v497 = vadd.f32 %v479, %v481
        %v498 = vadd.f32 %v497, %v483
        %v499 = vadd.f32 %v498, %v485
        %v500 = vadd.f32 %v499, %v487
        %v501 = vadd.f32 %v500, %v489
        %v502 = vadd.f32 %v501, %v491
        %v503 = vadd.f32 %v502, %v493
        %v504 = vadd.f32 %v503, %v495
        %v505 = vsel %vm396, %v480, 0.0
        %v506 = vsel %vm396, %v482, 0.0
        %v507 = vadd.f32 %v505, %v506
        %v508 = vsel %vm396, %v484, 0.0
        %v509 = vadd.f32 %v507, %v508
        %v510 = vsel %vm396, %v486, 0.0
        %v511 = vadd.f32 %v509, %v510
        %v512 = vsel %vm396, %v488, 0.0
        %v513 = vadd.f32 %v511, %v512
        %v514 = vsel %vm396, %v490, 0.0
        %v515 = vadd.f32 %v513, %v514
        %v516 = vsel %vm396, %v492, 0.0
        %v517 = vadd.f32 %v515, %v516
        %v518 = vsel %vm396, %v494, 0.0
        %v519 = vadd.f32 %v517, %v518
        %v520 = vsel %vm396, %v496, 0.0
        %v521 = vadd.f32 %v519, %v520
        %v522 = vadd.f32 %v414, %v504
        %v523 = vadd.f32 %v415, %v521
        %v524 = vmul.f32 %v479, %v479
        %v525 = vmul.f32 %v480, %v480
        %v526 = vmul.f32 %v481, %v481
        %v527 = vmul.f32 %v482, %v482
        %v528 = vmul.f32 %v483, %v483
        %v529 = vmul.f32 %v484, %v484
        %v530 = vmul.f32 %v485, %v485
        %v531 = vmul.f32 %v486, %v486
        %v532 = vmul.f32 %v487, %v487
        %v533 = vmul.f32 %v488, %v488
        %v534 = vmul.f32 %v489, %v489
        %v535 = vmul.f32 %v490, %v490
        %v536 = vmul.f32 %v491, %v491
        %v537 = vmul.f32 %v492, %v492
        %v538 = vmul.f32 %v493, %v493
        %v539 = vmul.f32 %v494, %v494
        %v540 = vmul.f32 %v495, %v495
        %v541 = vmul.f32 %v496, %v496
        %v542 = vadd.f32 %v524, %v526
        %v543 = vadd.f32 %v542, %v528
        %v544 = vadd.f32 %v543, %v530
        %v545 = vadd.f32 %v544, %v532
        %v546 = vadd.f32 %v545, %v534
        %v547 = vadd.f32 %v546, %v536
        %v548 = vadd.f32 %v547, %v538
        %v549 = vadd.f32 %v548, %v540
        %v550 = vsel %vm396, %v525, 0.0
        %v551 = vsel %vm396, %v527, 0.0
        %v552 = vadd.f32 %v550, %v551
        %v553 = vsel %vm396, %v529, 0.0
        %v554 = vadd.f32 %v552, %v553
        %v555 = vsel %vm396, %v531, 0.0
        %v556 = vadd.f32 %v554, %v555
        %v557 = vsel %vm396, %v533, 0.0
        %v558 = vadd.f32 %v556, %v557
        %v559 = vsel %vm396, %v535, 0.0
        %v560 = vadd.f32 %v558, %v559
        %v561 = vsel %vm396, %v537, 0.0
        %v562 = vadd.f32 %v560, %v561
        %v563 = vsel %vm396, %v539, 0.0
        %v564 = vadd.f32 %v562, %v563
        %v565 = vsel %vm396, %v541, 0.0
        %v566 = vadd.f32 %v564, %v565
        %v567 = vadd.f32 %v459, %v549
        %v568 = vadd.f32 %v460, %v566
        %v569 = vsel %vm396, %v523, 0.0
        %v570 = vadd.f32 %v522, %v569
        %v571 = vrot.slane %v570, 4
        %v572 = vadd.f32 %v570, %v571
        %v573 = vrot.slane %v572, 2
        %v574 = vadd.f32 %v572, %v573
        %v575 = vrot.slane %v574, 1
        %v576 = vadd.f32 %v574, %v575
        %v577 = vsel %vm396, %v568, 0.0
        %v578 = vadd.f32 %v567, %v577
        %v579 = vrot.slane %v578, 4
        %v580 = vadd.f32 %v578, %v579
        %v581 = vrot.slane %v580, 2
        %v582 = vadd.f32 %v580, %v581
        %v583 = vrot.slane %v582, 1
        %v584 = vadd.f32 %v582, %v583
        %v585 = vld [vmem:[%s4] sm:$0xff]
        %v586 = vld [vmem:[%s4 + $0x8] sm:$0xff]
        %v587 = vld [vmem:[%s4 + $0x10] sm:$0xff]
        %v588 = vld [vmem:[%s4 + $0x18] sm:$0xff]
        %v589 = vld [vmem:[%s4 + $0x20] sm:$0xff]
        %v590 = vld [vmem:[%s4 + $0x28] sm:$0xff]
        %v591 = vld [vmem:[%s4 + $0x30] sm:$0xff]
        %v592 = vld [vmem:[%s4 + $0x38] sm:$0xff]
        %v593 = vld [vmem:[%s4 + $0x40] sm:$0xff]
        %v594 = vld [vmem:[%s4 + $0x48] sm:$0xff]
        %v595 = vld [vmem:[%s4 + $0x50] sm:$0xff]
        %v596 = vld [vmem:[%s4 + $0x58] sm:$0xff]
        %v597 = vld [vmem:[%s4 + $0x60] sm:$0xff]
        %v598 = vld [vmem:[%s4 + $0x68] sm:$0xff]
        %v599 = vld [vmem:[%s4 + $0x70] sm:$0xff]
        %v600 = vld [vmem:[%s4 + $0x78] sm:$0xff]
        %601 = vmatpush.msra.mxu0 %v600
        %602 = vmatpush.msra.mxu0 %v599
        %603 = vmatpush.msra.mxu0 %v598
        %604 = vmatpush.msra.mxu0 %v597
        %605 = vmatpush.msra.mxu0 %v596
        %606 = vmatpush.msra.mxu0 %v595
        %607 = vmatpush.msra.mxu0 %v594
        %608 = vmatpush.msra.mxu0 %v593
        %609 = vmatpush.msra.mxu0 %v592
        %610 = vmatpush.msra.mxu0 %v591
        %611 = vmatpush.msra.mxu0 %v590
        %612 = vmatpush.msra.mxu0 %v589
        %613 = vmatpush.msra.mxu0 %v588
        %614 = vmatpush.msra.mxu0 %v587
        %615 = vmatpush.msra.mxu0 %v586
        %616 = vmatpush.msra.mxu0 %v585
        %617 = vmatmul.f32.gmra.mxu0 %v576
        %v618 = vpop.f32.mrf.mxu0
        %v619 = vadd.f32 0.0, %v618
        %620 = vdwg.mxu0
        %v621 = vld [vmem:[%s5] sm:$0xff]
        %v622 = vld [vmem:[%s5 + $0x8] sm:$0xff]
        %v623 = vld [vmem:[%s5 + $0x10] sm:$0xff]
        %v624 = vld [vmem:[%s5 + $0x18] sm:$0xff]
        %vm625 = vcmask 261120
        %v627 = vsel %vm625, %v619, 0
        %629 = vmatpush.msra.mxu0 0.0
        %630 = vmatpush.msra.mxu0 0.0
        %631 = vmatpush.msra.mxu0 0.0
        %632 = vmatpush.msra.mxu0 0.0
        %633 = vmatpush.msra.mxu0 0.0
        %634 = vmatpush.msra.mxu0 0.0
        %635 = vmatpush.msra.mxu0 0.0
        %636 = vmatpush.msra.mxu0 0.0
        %637 = vmatpush.msra.mxu0 0.0
        %638 = vmatpush.msra.mxu0 0.0
        %639 = vmatpush.msra.mxu0 0.0
        %640 = vmatpush.msra.mxu0 0.0
        %641 = vmatpush.msra.mxu0 %v624
        %642 = vmatpush.msra.mxu0 %v623
        %643 = vmatpush.msra.mxu0 %v622
        %644 = vmatpush.msra.mxu0 %v621
        %645 = vmatmul.f32.gmra.mxu0 %v627
        %v646 = vpop.f32.mrf.mxu0
        %v647 = vadd.f32 0.0, %v646
        %648 = vdwg.mxu0
        %649 = vmatpush.msra.mxu0 %v600
        %650 = vmatpush.msra.mxu0 %v599
        %651 = vmatpush.msra.mxu0 %v598
        %652 = vmatpush.msra.mxu0 %v597
        %653 = vmatpush.msra.mxu0 %v596
        %654 = vmatpush.msra.mxu0 %v595
        %655 = vmatpush.msra.mxu0 %v594
        %656 = vmatpush.msra.mxu0 %v593
        %657 = vmatpush.msra.mxu0 %v592
        %658 = vmatpush.msra.mxu0 %v591
        %659 = vmatpush.msra.mxu0 %v590
        %660 = vmatpush.msra.mxu0 %v589
        %661 = vmatpush.msra.mxu0 %v588
        %662 = vmatpush.msra.mxu0 %v587
        %663 = vmatpush.msra.mxu0 %v586
        %664 = vmatpush.msra.mxu0 %v585
        %665 = vmatmul.f32.gmra.mxu0 %v584
        %v666 = vpop.f32.mrf.mxu0
        %v667 = vadd.f32 0.0, %v666
        %668 = vdwg.mxu0
        %v670 = vsel %vm625, %v667, 0
        %672 = vmatpush.msra.mxu0 0.0
        %673 = vmatpush.msra.mxu0 0.0
        %674 = vmatpush.msra.mxu0 0.0
        %675 = vmatpush.msra.mxu0 0.0
        %676 = vmatpush.msra.mxu0 0.0
        %677 = vmatpush.msra.mxu0 0.0
        %678 = vmatpush.msra.mxu0 0.0
        %679 = vmatpush.msra.mxu0 0.0
        %680 = vmatpush.msra.mxu0 0.0
        %681 = vmatpush.msra.mxu0 0.0
        %682 = vmatpush.msra.mxu0 0.0
        %683 = vmatpush.msra.mxu0 0.0
        %684 = vmatpush.msra.mxu0 %v624
        %685 = vmatpush.msra.mxu0 %v623
        %686 = vmatpush.msra.mxu0 %v622
        %687 = vmatpush.msra.mxu0 %v621
        %688 = vmatmul.f32.gmra.mxu0 %v670
        %v689 = vpop.f32.mrf.mxu0
        %v690 = vadd.f32 0.0, %v689
        %691 = vdwg.mxu0
        %v692 = vmul.f32 %v647, 0.001953125
        %v693 = vmul.f32 %v690, 0.001953125
        %v694 = vmul.f32 %v692, %v692
        %v695 = vsub.f32 %v693, %v694
        %v696 = vmax.f32 %v695, 0.0
        %v697 = vadd.f32 %v696, 1e-05
        %v698 = vrsqrt.pop %v697
        %v699 = vmul.f32 %v698, %v697
        %v700 = vmul.f32 %v699, %v698
        %v701 = vmul.f32 0.5, %v700
        %v702 = vsub.f32 1.5, %v701
        %v703 = vmul.f32 %v698, %v702
        %vm704 = vweird.f32 %v697
        %vm705 = vweird.f32 %v698
        %vm706 = vmor %vm704, %vm705
        %v707 = vsel %vm706, %v698, %v703
        %v708 = vld [vmem:[%s2] sm:$0x1]
        %v709 = vmul.f32 %v707, %v708
        %v710 = vld [vmem:[%s3] sm:$0x1]
        %v711 = vmul.f32 %v692, %v709
        %v712 = vsub.f32 %v710, %v711
        %v713 = vlaneseq
        %v714 = vshrl.u32 %v713, 7
        %v715 = vadd.s32 %v714, 8
        %v716 = vlaneseq
        %v717 = vand.u32 %v716, 127
        %vm718 = vcmp.eq.s32.totalorder %v714, 0
        %vm719 = vcmp.eq.s32.totalorder %v715, 0
        %vm720 = vcmp.lt.s32.totalorder %v717, 64
        %vm721 = vmand %vm718, %vm720
        %vm722 = vmand %vm719, %vm720
        %v723 = vsel %vm721, 0.0, 1.0
        %v724 = vsel %vm722, 0.0, 1.0
        %v725 = vperm.slane %v709, 0
        %v726 = vmul.f32 %v370, %v725
        %v727 = vmul.f32 %v371, %v725
        %v728 = vmul.f32 %v372, %v725
        %v729 = vmul.f32 %v373, %v725
        %v730 = vmul.f32 %v374, %v725
        %v731 = vmul.f32 %v375, %v725
        %v732 = vmul.f32 %v376, %v725
        %v733 = vmul.f32 %v377, %v725
        %v734 = vmul.f32 %v378, %v725
        %v735 = vmul.f32 %v379, %v725
        %v736 = vmul.f32 %v380, %v725
        %v737 = vmul.f32 %v381, %v725
        %v738 = vmul.f32 %v382, %v725
        %v739 = vmul.f32 %v383, %v725
        %v740 = vmul.f32 %v384, %v725
        %v741 = vmul.f32 %v385, %v725
        %v742 = vmul.f32 %v386, %v725
        %v743 = vmul.f32 %v387, %v725
        %v745 = vperm.slane %v712, 0
        %v747 = vadd.f32 %v726, %v745
        %v748 = vadd.f32 %v727, %v745
        %v749 = vadd.f32 %v728, %v745
        %v750 = vadd.f32 %v729, %v745
        %v751 = vadd.f32 %v730, %v745
        %v752 = vadd.f32 %v731, %v745
        %v753 = vadd.f32 %v732, %v745
        %v754 = vadd.f32 %v733, %v745
        %v755 = vadd.f32 %v734, %v745
        %v756 = vadd.f32 %v735, %v745
        %v757 = vadd.f32 %v736, %v745
        %v758 = vadd.f32 %v737, %v745
        %v759 = vadd.f32 %v738, %v745
        %v760 = vadd.f32 %v739, %v745
        %v761 = vadd.f32 %v740, %v745
        %v762 = vadd.f32 %v741, %v745
        %v763 = vadd.f32 %v742, %v745
        %v764 = vadd.f32 %v743, %v745
        %v765 = vxor.u32 %v747, 2147483648
        %v766 = vxor.u32 %v748, 2147483648
        %v767 = vxor.u32 %v749, 2147483648
        %v768 = vxor.u32 %v750, 2147483648
        %v769 = vxor.u32 %v751, 2147483648
        %v770 = vxor.u32 %v752, 2147483648
        %v771 = vxor.u32 %v753, 2147483648
        %v772 = vxor.u32 %v754, 2147483648
        %v773 = vxor.u32 %v755, 2147483648
        %v774 = vxor.u32 %v756, 2147483648
        %v775 = vxor.u32 %v757, 2147483648
        %v776 = vxor.u32 %v758, 2147483648
        %v777 = vxor.u32 %v759, 2147483648
        %v778 = vxor.u32 %v760, 2147483648
        %v779 = vxor.u32 %v761, 2147483648
        %v780 = vxor.u32 %v762, 2147483648
        %v781 = vxor.u32 %v763, 2147483648
        %v782 = vxor.u32 %v764, 2147483648
        %v783 = vmul.f32 %v765, 1.442695
        %v784 = vpow.pop %v783
        %v785 = vmul.f32 %v766, 1.442695
        %v786 = vpow.pop %v785
        %v787 = vmul.f32 %v767, 1.442695
        %v788 = vpow.pop %v787
        %v789 = vmul.f32 %v768, 1.442695
        %v790 = vpow.pop %v789
        %v791 = vmul.f32 %v769, 1.442695
        %v792 = vpow.pop %v791
        %v793 = vmul.f32 %v770, 1.442695
        %v794 = vpow.pop %v793
        %v795 = vmul.f32 %v771, 1.442695
        %v796 = vpow.pop %v795
        %v797 = vmul.f32 %v772, 1.442695
        %v798 = vpow.pop %v797
        %v799 = vmul.f32 %v773, 1.442695
        %v800 = vpow.pop %v799
        %v801 = vmul.f32 %v774, 1.442695
        %v802 = vpow.pop %v801
        %v803 = vmul.f32 %v775, 1.442695
        %v804 = vpow.pop %v803
        %v805 = vmul.f32 %v776, 1.442695
        %v806 = vpow.pop %v805
        %v807 = vmul.f32 %v777, 1.442695
        %v808 = vpow.pop %v807
        %v809 = vmul.f32 %v778, 1.442695
        %v810 = vpow.pop %v809
        %v811 = vmul.f32 %v779, 1.442695
        %v812 = vpow.pop %v811
        %v813 = vmul.f32 %v780, 1.442695
        %v814 = vpow.pop %v813
        %v815 = vmul.f32 %v781, 1.442695
        %v816 = vpow.pop %v815
        %v817 = vmul.f32 %v782, 1.442695
        %v818 = vpow.pop %v817
        %v819 = vadd.f32 %v784, 1.0
        %v820 = vadd.f32 %v786, 1.0
        %v821 = vadd.f32 %v788, 1.0
        %v822 = vadd.f32 %v790, 1.0
        %v823 = vadd.f32 %v792, 1.0
        %v824 = vadd.f32 %v794, 1.0
        %v825 = vadd.f32 %v796, 1.0
        %v826 = vadd.f32 %v798, 1.0
        %v827 = vadd.f32 %v800, 1.0
        %v828 = vadd.f32 %v802, 1.0
        %v829 = vadd.f32 %v804, 1.0
        %v830 = vadd.f32 %v806, 1.0
        %v831 = vadd.f32 %v808, 1.0
        %v832 = vadd.f32 %v810, 1.0
        %v833 = vadd.f32 %v812, 1.0
        %v834 = vadd.f32 %v814, 1.0
        %v835 = vadd.f32 %v816, 1.0
        %v836 = vadd.f32 %v818, 1.0
        %v837 = vrcp.pop %v819
        %v838 = vmul.f32 %v819, %v837
        %v839 = vsub.f32 1.0, %v838
        %v840 = vmul.f32 %v837, %v839
        %v841 = vadd.f32 %v837, %v840
        %vm842 = vweird.f32 %v819
        %vm843 = vweird.f32 %v837
        %vm844 = vmor %vm842, %vm843
        %v845 = vsel %vm844, %v837, %v841
        %v846 = vand.u32 2147483647, %v819
        %vm847 = vcmp.eq.f32.partialorder %v846, 8.507059e+37
        %v848 = vand.u32 %v819, 2147483648
        %v849 = vor.u32 1.1754944e-38, %v848
        %v850 = vsel %vm847, %v849, %v845
        %v851 = vmul.f32 1.0, %v850
        %v852 = vrcp.pop %v820
        %v853 = vmul.f32 %v820, %v852
        %v854 = vsub.f32 1.0, %v853
        %v855 = vmul.f32 %v852, %v854
        %v856 = vadd.f32 %v852, %v855
        %vm857 = vweird.f32 %v820
        %vm858 = vweird.f32 %v852
        %vm859 = vmor %vm857, %vm858
        %v860 = vsel %vm859, %v852, %v856
        %v861 = vand.u32 2147483647, %v820
        %vm862 = vcmp.eq.f32.partialorder %v861, 8.507059e+37
        %v863 = vand.u32 %v820, 2147483648
        %v864 = vor.u32 1.1754944e-38, %v863
        %v865 = vsel %vm862, %v864, %v860
        %v866 = vmul.f32 1.0, %v865
        %v867 = vrcp.pop %v821
        %v868 = vmul.f32 %v821, %v867
        %v869 = vsub.f32 1.0, %v868
        %v870 = vmul.f32 %v867, %v869
        %v871 = vadd.f32 %v867, %v870
        %vm872 = vweird.f32 %v821
        %vm873 = vweird.f32 %v867
        %vm874 = vmor %vm872, %vm873
        %v875 = vsel %vm874, %v867, %v871
        %v876 = vand.u32 2147483647, %v821
        %vm877 = vcmp.eq.f32.partialorder %v876, 8.507059e+37
        %v878 = vand.u32 %v821, 2147483648
        %v879 = vor.u32 1.1754944e-38, %v878
        %v880 = vsel %vm877, %v879, %v875
        %v881 = vmul.f32 1.0, %v880
        %v882 = vrcp.pop %v822
        %v883 = vmul.f32 %v822, %v882
        %v884 = vsub.f32 1.0, %v883
        %v885 = vmul.f32 %v882, %v884
        %v886 = vadd.f32 %v882, %v885
        %vm887 = vweird.f32 %v822
        %vm888 = vweird.f32 %v882
        %vm889 = vmor %vm887, %vm888
        %v890 = vsel %vm889, %v882, %v886
        %v891 = vand.u32 2147483647, %v822
        %vm892 = vcmp.eq.f32.partialorder %v891, 8.507059e+37
        %v893 = vand.u32 %v822, 2147483648
        %v894 = vor.u32 1.1754944e-38, %v893
        %v895 = vsel %vm892, %v894, %v890
        %v896 = vmul.f32 1.0, %v895
        %v897 = vrcp.pop %v823
        %v898 = vmul.f32 %v823, %v897
        %v899 = vsub.f32 1.0, %v898
        %v900 = vmul.f32 %v897, %v899
        %v901 = vadd.f32 %v897, %v900
        %vm902 = vweird.f32 %v823
        %vm903 = vweird.f32 %v897
        %vm904 = vmor %vm902, %vm903
        %v905 = vsel %vm904, %v897, %v901
        %v906 = vand.u32 2147483647, %v823
        %vm907 = vcmp.eq.f32.partialorder %v906, 8.507059e+37
        %v908 = vand.u32 %v823, 2147483648
        %v909 = vor.u32 1.1754944e-38, %v908
        %v910 = vsel %vm907, %v909, %v905
        %v911 = vmul.f32 1.0, %v910
        %v912 = vrcp.pop %v824
        %v913 = vmul.f32 %v824, %v912
        %v914 = vsub.f32 1.0, %v913
        %v915 = vmul.f32 %v912, %v914
        %v916 = vadd.f32 %v912, %v915
        %vm917 = vweird.f32 %v824
        %vm918 = vweird.f32 %v912
        %vm919 = vmor %vm917, %vm918
        %v920 = vsel %vm919, %v912, %v916
        %v921 = vand.u32 2147483647, %v824
        %vm922 = vcmp.eq.f32.partialorder %v921, 8.507059e+37
        %v923 = vand.u32 %v824, 2147483648
        %v924 = vor.u32 1.1754944e-38, %v923
        %v925 = vsel %vm922, %v924, %v920
        %v926 = vmul.f32 1.0, %v925
        %v927 = vrcp.pop %v825
        %v928 = vmul.f32 %v825, %v927
        %v929 = vsub.f32 1.0, %v928
        %v930 = vmul.f32 %v927, %v929
        %v931 = vadd.f32 %v927, %v930
        %vm932 = vweird.f32 %v825
        %vm933 = vweird.f32 %v927
        %vm934 = vmor %vm932, %vm933
        %v935 = vsel %vm934, %v927, %v931
        %v936 = vand.u32 2147483647, %v825
        %vm937 = vcmp.eq.f32.partialorder %v936, 8.507059e+37
        %v938 = vand.u32 %v825, 2147483648
        %v939 = vor.u32 1.1754944e-38, %v938
        %v940 = vsel %vm937, %v939, %v935
        %v941 = vmul.f32 1.0, %v940
        %v942 = vrcp.pop %v826
        %v943 = vmul.f32 %v826, %v942
        %v944 = vsub.f32 1.0, %v943
        %v945 = vmul.f32 %v942, %v944
        %v946 = vadd.f32 %v942, %v945
        %vm947 = vweird.f32 %v826
        %vm948 = vweird.f32 %v942
        %vm949 = vmor %vm947, %vm948
        %v950 = vsel %vm949, %v942, %v946
        %v951 = vand.u32 2147483647, %v826
        %vm952 = vcmp.eq.f32.partialorder %v951, 8.507059e+37
        %v953 = vand.u32 %v826, 2147483648
        %v954 = vor.u32 1.1754944e-38, %v953
        %v955 = vsel %vm952, %v954, %v950
        %v956 = vmul.f32 1.0, %v955
        %v957 = vrcp.pop %v827
        %v958 = vmul.f32 %v827, %v957
        %v959 = vsub.f32 1.0, %v958
        %v960 = vmul.f32 %v957, %v959
        %v961 = vadd.f32 %v957, %v960
        %vm962 = vweird.f32 %v827
        %vm963 = vweird.f32 %v957
        %vm964 = vmor %vm962, %vm963
        %v965 = vsel %vm964, %v957, %v961
        %v966 = vand.u32 2147483647, %v827
        %vm967 = vcmp.eq.f32.partialorder %v966, 8.507059e+37
        %v968 = vand.u32 %v827, 2147483648
        %v969 = vor.u32 1.1754944e-38, %v968
        %v970 = vsel %vm967, %v969, %v965
        %v971 = vmul.f32 1.0, %v970
        %v972 = vrcp.pop %v828
        %v973 = vmul.f32 %v828, %v972
        %v974 = vsub.f32 1.0, %v973
        %v975 = vmul.f32 %v972, %v974
        %v976 = vadd.f32 %v972, %v975
        %vm977 = vweird.f32 %v828
        %vm978 = vweird.f32 %v972
        %vm979 = vmor %vm977, %vm978
        %v980 = vsel %vm979, %v972, %v976
        %v981 = vand.u32 2147483647, %v828
        %vm982 = vcmp.eq.f32.partialorder %v981, 8.507059e+37
        %v983 = vand.u32 %v828, 2147483648
        %v984 = vor.u32 1.1754944e-38, %v983
        %v985 = vsel %vm982, %v984, %v980
        %v986 = vmul.f32 1.0, %v985
        %v987 = vrcp.pop %v829
        %v988 = vmul.f32 %v829, %v987
        %v989 = vsub.f32 1.0, %v988
        %v990 = vmul.f32 %v987, %v989
        %v991 = vadd.f32 %v987, %v990
        %vm992 = vweird.f32 %v829
        %vm993 = vweird.f32 %v987
        %vm994 = vmor %vm992, %vm993
        %v995 = vsel %vm994, %v987, %v991
        %v996 = vand.u32 2147483647, %v829
        %vm997 = vcmp.eq.f32.partialorder %v996, 8.507059e+37
        %v998 = vand.u32 %v829, 2147483648
        %v999 = vor.u32 1.1754944e-38, %v998
        %v1000 = vsel %vm997, %v999, %v995
        %v1001 = vmul.f32 1.0, %v1000
        %v1002 = vrcp.pop %v830
        %v1003 = vmul.f32 %v830, %v1002
        %v1004 = vsub.f32 1.0, %v1003
        %v1005 = vmul.f32 %v1002, %v1004
        %v1006 = vadd.f32 %v1002, %v1005
        %vm1007 = vweird.f32 %v830
        %vm1008 = vweird.f32 %v1002
        %vm1009 = vmor %vm1007, %vm1008
        %v1010 = vsel %vm1009, %v1002, %v1006
        %v1011 = vand.u32 2147483647, %v830
        %vm1012 = vcmp.eq.f32.partialorder %v1011, 8.507059e+37
        %v1013 = vand.u32 %v830, 2147483648
        %v1014 = vor.u32 1.1754944e-38, %v1013
        %v1015 = vsel %vm1012, %v1014, %v1010
        %v1016 = vmul.f32 1.0, %v1015
        %v1017 = vrcp.pop %v831
        %v1018 = vmul.f32 %v831, %v1017
        %v1019 = vsub.f32 1.0, %v1018
        %v1020 = vmul.f32 %v1017, %v1019
        %v1021 = vadd.f32 %v1017, %v1020
        %vm1022 = vweird.f32 %v831
        %vm1023 = vweird.f32 %v1017
        %vm1024 = vmor %vm1022, %vm1023
        %v1025 = vsel %vm1024, %v1017, %v1021
        %v1026 = vand.u32 2147483647, %v831
        %vm1027 = vcmp.eq.f32.partialorder %v1026, 8.507059e+37
        %v1028 = vand.u32 %v831, 2147483648
        %v1029 = vor.u32 1.1754944e-38, %v1028
        %v1030 = vsel %vm1027, %v1029, %v1025
        %v1031 = vmul.f32 1.0, %v1030
        %v1032 = vrcp.pop %v832
        %v1033 = vmul.f32 %v832, %v1032
        %v1034 = vsub.f32 1.0, %v1033
        %v1035 = vmul.f32 %v1032, %v1034
        %v1036 = vadd.f32 %v1032, %v1035
        %vm1037 = vweird.f32 %v832
        %vm1038 = vweird.f32 %v1032
        %vm1039 = vmor %vm1037, %vm1038
        %v1040 = vsel %vm1039, %v1032, %v1036
        %v1041 = vand.u32 2147483647, %v832
        %vm1042 = vcmp.eq.f32.partialorder %v1041, 8.507059e+37
        %v1043 = vand.u32 %v832, 2147483648
        %v1044 = vor.u32 1.1754944e-38, %v1043
        %v1045 = vsel %vm1042, %v1044, %v1040
        %v1046 = vmul.f32 1.0, %v1045
        %v1047 = vrcp.pop %v833
        %v1048 = vmul.f32 %v833, %v1047
        %v1049 = vsub.f32 1.0, %v1048
        %v1050 = vmul.f32 %v1047, %v1049
        %v1051 = vadd.f32 %v1047, %v1050
        %vm1052 = vweird.f32 %v833
        %vm1053 = vweird.f32 %v1047
        %vm1054 = vmor %vm1052, %vm1053
        %v1055 = vsel %vm1054, %v1047, %v1051
        %v1056 = vand.u32 2147483647, %v833
        %vm1057 = vcmp.eq.f32.partialorder %v1056, 8.507059e+37
        %v1058 = vand.u32 %v833, 2147483648
        %v1059 = vor.u32 1.1754944e-38, %v1058
        %v1060 = vsel %vm1057, %v1059, %v1055
        %v1061 = vmul.f32 1.0, %v1060
        %v1062 = vrcp.pop %v834
        %v1063 = vmul.f32 %v834, %v1062
        %v1064 = vsub.f32 1.0, %v1063
        %v1065 = vmul.f32 %v1062, %v1064
        %v1066 = vadd.f32 %v1062, %v1065
        %vm1067 = vweird.f32 %v834
        %vm1068 = vweird.f32 %v1062
        %vm1069 = vmor %vm1067, %vm1068
        %v1070 = vsel %vm1069, %v1062, %v1066
        %v1071 = vand.u32 2147483647, %v834
        %vm1072 = vcmp.eq.f32.partialorder %v1071, 8.507059e+37
        %v1073 = vand.u32 %v834, 2147483648
        %v1074 = vor.u32 1.1754944e-38, %v1073
        %v1075 = vsel %vm1072, %v1074, %v1070
        %v1076 = vmul.f32 1.0, %v1075
        %v1077 = vrcp.pop %v835
        %v1078 = vmul.f32 %v835, %v1077
        %v1079 = vsub.f32 1.0, %v1078
        %v1080 = vmul.f32 %v1077, %v1079
        %v1081 = vadd.f32 %v1077, %v1080
        %vm1082 = vweird.f32 %v835
        %vm1083 = vweird.f32 %v1077
        %vm1084 = vmor %vm1082, %vm1083
        %v1085 = vsel %vm1084, %v1077, %v1081
        %v1086 = vand.u32 2147483647, %v835
        %vm1087 = vcmp.eq.f32.partialorder %v1086, 8.507059e+37
        %v1088 = vand.u32 %v835, 2147483648
        %v1089 = vor.u32 1.1754944e-38, %v1088
        %v1090 = vsel %vm1087, %v1089, %v1085
        %v1091 = vmul.f32 1.0, %v1090
        %v1092 = vrcp.pop %v836
        %v1093 = vmul.f32 %v836, %v1092
        %v1094 = vsub.f32 1.0, %v1093
        %v1095 = vmul.f32 %v1092, %v1094
        %v1096 = vadd.f32 %v1092, %v1095
        %vm1097 = vweird.f32 %v836
        %vm1098 = vweird.f32 %v1092
        %vm1099 = vmor %vm1097, %vm1098
        %v1100 = vsel %vm1099, %v1092, %v1096
        %v1101 = vand.u32 2147483647, %v836
        %vm1102 = vcmp.eq.f32.partialorder %v1101, 8.507059e+37
        %v1103 = vand.u32 %v836, 2147483648
        %v1104 = vor.u32 1.1754944e-38, %v1103
        %v1105 = vsel %vm1102, %v1104, %v1100
        %v1106 = vmul.f32 1.0, %v1105
        %v1107 = vmul.f32 %v747, %v851
        %v1108 = vmul.f32 %v748, %v866
        %v1109 = vmul.f32 %v749, %v881
        %v1110 = vmul.f32 %v750, %v896
        %v1111 = vmul.f32 %v751, %v911
        %v1112 = vmul.f32 %v752, %v926
        %v1113 = vmul.f32 %v753, %v941
        %v1114 = vmul.f32 %v754, %v956
        %v1115 = vmul.f32 %v755, %v971
        %v1116 = vmul.f32 %v756, %v986
        %v1117 = vmul.f32 %v757, %v1001
        %v1118 = vmul.f32 %v758, %v1016
        %v1119 = vmul.f32 %v759, %v1031
        %v1120 = vmul.f32 %v760, %v1046
        %v1121 = vmul.f32 %v761, %v1061
        %v1122 = vmul.f32 %v762, %v1076
        %v1123 = vmul.f32 %v763, %v1091
        %v1124 = vmul.f32 %v764, %v1106
        %v1125 = vmul.f32 %v1107, %v723
        %v1126 = vmul.f32 %v1108, %v724
        %v1127 = vmul.f32 %v1109, %v723
        %v1128 = vmul.f32 %v1110, %v724
        %v1129 = vmul.f32 %v1111, %v723
        %v1130 = vmul.f32 %v1112, %v724
        %v1131 = vmul.f32 %v1113, %v723
        %v1132 = vmul.f32 %v1114, %v724
        %v1133 = vmul.f32 %v1115, %v723
        %v1134 = vmul.f32 %v1116, %v724
        %v1135 = vmul.f32 %v1117, %v723
        %v1136 = vmul.f32 %v1118, %v724
        %v1137 = vmul.f32 %v1119, %v723
        %v1138 = vmul.f32 %v1120, %v724
        %v1139 = vmul.f32 %v1121, %v723
        %v1140 = vmul.f32 %v1122, %v724
        %v1141 = vmul.f32 %v1123, %v723
        %v1142 = vmul.f32 %v1124, %v724
        %v1143 = vpack.c.bf16 %v1125, %v1125
        %v1144 = vpack.c.bf16 %v1126, %v1126
        %v1145 = vpack.c.bf16 %v1127, %v1127
        %v1146 = vpack.c.bf16 %v1128, %v1128
        %v1147 = vpack.c.bf16 %v1129, %v1129
        %v1148 = vpack.c.bf16 %v1130, %v1130
        %v1149 = vpack.c.bf16 %v1131, %v1131
        %v1150 = vpack.c.bf16 %v1132, %v1132
        %v1151 = vpack.c.bf16 %v1133, %v1133
        %v1152 = vpack.c.bf16 %v1134, %v1134
        %v1153 = vpack.c.bf16 %v1135, %v1135
        %v1154 = vpack.c.bf16 %v1136, %v1136
        %v1155 = vpack.c.bf16 %v1137, %v1137
        %v1156 = vpack.c.bf16 %v1138, %v1138
        %v1157 = vpack.c.bf16 %v1139, %v1139
        %v1158 = vpack.c.bf16 %v1140, %v1140
        %v1159 = vpack.c.bf16 %v1141, %v1141
        %v1160 = vpack.c.bf16 %v1142, %v1142
        %1161 = vst [vmem:[#allocation2] sm:$0xf] %v1143
        %vm1162 = vcmask 1040384
        %vm1163 = vsmask.f32 256
        %vm1164 = vmand %vm1162, %vm1163
        %v1165 = vld [vmem:[#allocation2 + $0x4] sm:$0x1]
        %v1166 = vsel %vm1164, %v1144, %v1165
        %1167 = vst [vmem:[#allocation2 + $0x4] sm:$0x1] %v1166
        %1168 = vst [vmem:[#allocation2 + $0x8] sm:$0xf] %v1145
        %v1169 = vld [vmem:[#allocation2 + $0xc] sm:$0x1]
        %v1170 = vsel %vm1164, %v1146, %v1169
        %1171 = vst [vmem:[#allocation2 + $0xc] sm:$0x1] %v1170
        %1172 = vst [vmem:[#allocation2 + $0x10] sm:$0xf] %v1147
        %v1173 = vld [vmem:[#allocation2 + $0x14] sm:$0x1]
        %v1174 = vsel %vm1164, %v1148, %v1173
        %1175 = vst [vmem:[#allocation2 + $0x14] sm:$0x1] %v1174
        %1176 = vst [vmem:[#allocation2 + $0x18] sm:$0xf] %v1149
        %v1177 = vld [vmem:[#allocation2 + $0x1c] sm:$0x1]
        %v1178 = vsel %vm1164, %v1150, %v1177
        %1179 = vst [vmem:[#allocation2 + $0x1c] sm:$0x1] %v1178
        %1180 = vst [vmem:[#allocation2 + $0x20] sm:$0xf] %v1151
        %v1181 = vld [vmem:[#allocation2 + $0x24] sm:$0x1]
        %v1182 = vsel %vm1164, %v1152, %v1181
        %1183 = vst [vmem:[#allocation2 + $0x24] sm:$0x1] %v1182
        %1184 = vst [vmem:[#allocation2 + $0x28] sm:$0xf] %v1153
        %v1185 = vld [vmem:[#allocation2 + $0x2c] sm:$0x1]
        %v1186 = vsel %vm1164, %v1154, %v1185
        %1187 = vst [vmem:[#allocation2 + $0x2c] sm:$0x1] %v1186
        %1188 = vst [vmem:[#allocation2 + $0x30] sm:$0xf] %v1155
        %v1189 = vld [vmem:[#allocation2 + $0x34] sm:$0x1]
        %v1190 = vsel %vm1164, %v1156, %v1189
        %1191 = vst [vmem:[#allocation2 + $0x34] sm:$0x1] %v1190
        %1192 = vst [vmem:[#allocation2 + $0x38] sm:$0xf] %v1157
        %v1193 = vld [vmem:[#allocation2 + $0x3c] sm:$0x1]
        %v1194 = vsel %vm1164, %v1158, %v1193
        %1195 = vst [vmem:[#allocation2 + $0x3c] sm:$0x1] %v1194
        %1196 = vst [vmem:[#allocation2 + $0x40] sm:$0xf] %v1159
        %v1197 = vld [vmem:[#allocation2 + $0x44] sm:$0x1]
        %v1198 = vsel %vm1164, %v1160, %v1197
        %1199 = vst [vmem:[#allocation2 + $0x44] sm:$0x1] %v1198
        %v1200 = vld [vmem:[%s350] sm:$0xf]
        %v1201 = vld [vmem:[%s350 + $0x4] sm:$0x1]
        %v1202 = vld [vmem:[%s350 + $0x8] sm:$0xf]
        %v1203 = vld [vmem:[%s350 + $0xc] sm:$0x1]
        %v1204 = vld [vmem:[%s350 + $0x10] sm:$0xf]
        %v1205 = vld [vmem:[%s350 + $0x14] sm:$0x1]
        %v1206 = vld [vmem:[%s350 + $0x18] sm:$0xf]
        %v1207 = vld [vmem:[%s350 + $0x1c] sm:$0x1]
        %v1208 = vld [vmem:[%s350 + $0x20] sm:$0xf]
        %v1209 = vld [vmem:[%s350 + $0x24] sm:$0x1]
        %v1210 = vld [vmem:[%s350 + $0x28] sm:$0xf]
        %v1211 = vld [vmem:[%s350 + $0x2c] sm:$0x1]
        %v1212 = vld [vmem:[%s350 + $0x30] sm:$0xf]
        %v1213 = vld [vmem:[%s350 + $0x34] sm:$0x1]
        %v1214 = vld [vmem:[%s350 + $0x38] sm:$0xf]
        %v1215 = vld [vmem:[%s350 + $0x3c] sm:$0x1]
        %v1216 = vld [vmem:[%s350 + $0x40] sm:$0xf]
        %v1217 = vld [vmem:[%s350 + $0x44] sm:$0x1]
        %v1218 = vunpack.c.l.bf16 %v1200
        %v1219 = vunpack.c.l.bf16 %v1201
        %v1220 = vunpack.c.l.bf16 %v1202
        %v1221 = vunpack.c.l.bf16 %v1203
        %v1222 = vunpack.c.l.bf16 %v1204
        %v1223 = vunpack.c.l.bf16 %v1205
        %v1224 = vunpack.c.l.bf16 %v1206
        %v1225 = vunpack.c.l.bf16 %v1207
        %v1226 = vunpack.c.l.bf16 %v1208
        %v1227 = vunpack.c.l.bf16 %v1209
        %v1228 = vunpack.c.l.bf16 %v1210
        %v1229 = vunpack.c.l.bf16 %v1211
        %v1230 = vunpack.c.l.bf16 %v1212
        %v1231 = vunpack.c.l.bf16 %v1213
        %v1232 = vunpack.c.l.bf16 %v1214
        %v1233 = vunpack.c.l.bf16 %v1215
        %v1234 = vunpack.c.l.bf16 %v1216
        %v1235 = vunpack.c.l.bf16 %v1217
        %v1236 = vmul.f32 %v1218, %v725
        %v1237 = vmul.f32 %v1219, %v725
        %v1238 = vmul.f32 %v1220, %v725
        %v1239 = vmul.f32 %v1221, %v725
        %v1240 = vmul.f32 %v1222, %v725
        %v1241 = vmul.f32 %v1223, %v725
        %v1242 = vmul.f32 %v1224, %v725
        %v1243 = vmul.f32 %v1225, %v725
        %v1244 = vmul.f32 %v1226, %v725
        %v1245 = vmul.f32 %v1227, %v725
        %v1246 = vmul.f32 %v1228, %v725
        %v1247 = vmul.f32 %v1229, %v725
        %v1248 = vmul.f32 %v1230, %v725
        %v1249 = vmul.f32 %v1231, %v725
        %v1250 = vmul.f32 %v1232, %v725
        %v1251 = vmul.f32 %v1233, %v725
        %v1252 = vmul.f32 %v1234, %v725
        %v1253 = vmul.f32 %v1235, %v725
        %v1254 = vadd.f32 %v1236, %v745
        %v1255 = vadd.f32 %v1237, %v745
        %v1256 = vadd.f32 %v1238, %v745
        %v1257 = vadd.f32 %v1239, %v745
        %v1258 = vadd.f32 %v1240, %v745
        %v1259 = vadd.f32 %v1241, %v745
        %v1260 = vadd.f32 %v1242, %v745
        %v1261 = vadd.f32 %v1243, %v745
        %v1262 = vadd.f32 %v1244, %v745
        %v1263 = vadd.f32 %v1245, %v745
        %v1264 = vadd.f32 %v1246, %v745
        %v1265 = vadd.f32 %v1247, %v745
        %v1266 = vadd.f32 %v1248, %v745
        %v1267 = vadd.f32 %v1249, %v745
        %v1268 = vadd.f32 %v1250, %v745
        %v1269 = vadd.f32 %v1251, %v745
        %v1270 = vadd.f32 %v1252, %v745
        %v1271 = vadd.f32 %v1253, %v745
        %v1272 = vxor.u32 %v1254, 2147483648
        %v1273 = vxor.u32 %v1255, 2147483648
        %v1274 = vxor.u32 %v1256, 2147483648
        %v1275 = vxor.u32 %v1257, 2147483648
        %v1276 = vxor.u32 %v1258, 2147483648
        %v1277 = vxor.u32 %v1259, 2147483648
        %v1278 = vxor.u32 %v1260, 2147483648
        %v1279 = vxor.u32 %v1261, 2147483648
        %v1280 = vxor.u32 %v1262, 2147483648
        %v1281 = vxor.u32 %v1263, 2147483648
        %v1282 = vxor.u32 %v1264, 2147483648
        %v1283 = vxor.u32 %v1265, 2147483648
        %v1284 = vxor.u32 %v1266, 2147483648
        %v1285 = vxor.u32 %v1267, 2147483648
        %v1286 = vxor.u32 %v1268, 2147483648
        %v1287 = vxor.u32 %v1269, 2147483648
        %v1288 = vxor.u32 %v1270, 2147483648
        %v1289 = vxor.u32 %v1271, 2147483648
        %v1290 = vmul.f32 %v1272, 1.442695
        %v1291 = vpow.pop %v1290
        %v1292 = vmul.f32 %v1273, 1.442695
        %v1293 = vpow.pop %v1292
        %v1294 = vmul.f32 %v1274, 1.442695
        %v1295 = vpow.pop %v1294
        %v1296 = vmul.f32 %v1275, 1.442695
        %v1297 = vpow.pop %v1296
        %v1298 = vmul.f32 %v1276, 1.442695
        %v1299 = vpow.pop %v1298
        %v1300 = vmul.f32 %v1277, 1.442695
        %v1301 = vpow.pop %v1300
        %v1302 = vmul.f32 %v1278, 1.442695
        %v1303 = vpow.pop %v1302
        %v1304 = vmul.f32 %v1279, 1.442695
        %v1305 = vpow.pop %v1304
        %v1306 = vmul.f32 %v1280, 1.442695
        %v1307 = vpow.pop %v1306
        %v1308 = vmul.f32 %v1281, 1.442695
        %v1309 = vpow.pop %v1308
        %v1310 = vmul.f32 %v1282, 1.442695
        %v1311 = vpow.pop %v1310
        %v1312 = vmul.f32 %v1283, 1.442695
        %v1313 = vpow.pop %v1312
        %v1314 = vmul.f32 %v1284, 1.442695
        %v1315 = vpow.pop %v1314
        %v1316 = vmul.f32 %v1285, 1.442695
        %v1317 = vpow.pop %v1316
        %v1318 = vmul.f32 %v1286, 1.442695
        %v1319 = vpow.pop %v1318
        %v1320 = vmul.f32 %v1287, 1.442695
        %v1321 = vpow.pop %v1320
        %v1322 = vmul.f32 %v1288, 1.442695
        %v1323 = vpow.pop %v1322
        %v1324 = vmul.f32 %v1289, 1.442695
        %v1325 = vpow.pop %v1324
        %v1326 = vadd.f32 %v1291, 1.0
        %v1327 = vadd.f32 %v1293, 1.0
        %v1328 = vadd.f32 %v1295, 1.0
        %v1329 = vadd.f32 %v1297, 1.0
        %v1330 = vadd.f32 %v1299, 1.0
        %v1331 = vadd.f32 %v1301, 1.0
        %v1332 = vadd.f32 %v1303, 1.0
        %v1333 = vadd.f32 %v1305, 1.0
        %v1334 = vadd.f32 %v1307, 1.0
        %v1335 = vadd.f32 %v1309, 1.0
        %v1336 = vadd.f32 %v1311, 1.0
        %v1337 = vadd.f32 %v1313, 1.0
        %v1338 = vadd.f32 %v1315, 1.0
        %v1339 = vadd.f32 %v1317, 1.0
        %v1340 = vadd.f32 %v1319, 1.0
        %v1341 = vadd.f32 %v1321, 1.0
        %v1342 = vadd.f32 %v1323, 1.0
        %v1343 = vadd.f32 %v1325, 1.0
        %v1344 = vrcp.pop %v1326
        %v1345 = vmul.f32 %v1326, %v1344
        %v1346 = vsub.f32 1.0, %v1345
        %v1347 = vmul.f32 %v1344, %v1346
        %v1348 = vadd.f32 %v1344, %v1347
        %vm1349 = vweird.f32 %v1326
        %vm1350 = vweird.f32 %v1344
        %vm1351 = vmor %vm1349, %vm1350
        %v1352 = vsel %vm1351, %v1344, %v1348
        %v1353 = vand.u32 2147483647, %v1326
        %vm1354 = vcmp.eq.f32.partialorder %v1353, 8.507059e+37
        %v1355 = vand.u32 %v1326, 2147483648
        %v1356 = vor.u32 1.1754944e-38, %v1355
        %v1357 = vsel %vm1354, %v1356, %v1352
        %v1358 = vmul.f32 1.0, %v1357
        %v1359 = vrcp.pop %v1327
        %v1360 = vmul.f32 %v1327, %v1359
        %v1361 = vsub.f32 1.0, %v1360
        %v1362 = vmul.f32 %v1359, %v1361
        %v1363 = vadd.f32 %v1359, %v1362
        %vm1364 = vweird.f32 %v1327
        %vm1365 = vweird.f32 %v1359
        %vm1366 = vmor %vm1364, %vm1365
        %v1367 = vsel %vm1366, %v1359, %v1363
        %v1368 = vand.u32 2147483647, %v1327
        %vm1369 = vcmp.eq.f32.partialorder %v1368, 8.507059e+37
        %v1370 = vand.u32 %v1327, 2147483648
        %v1371 = vor.u32 1.1754944e-38, %v1370
        %v1372 = vsel %vm1369, %v1371, %v1367
        %v1373 = vmul.f32 1.0, %v1372
        %v1374 = vrcp.pop %v1328
        %v1375 = vmul.f32 %v1328, %v1374
        %v1376 = vsub.f32 1.0, %v1375
        %v1377 = vmul.f32 %v1374, %v1376
        %v1378 = vadd.f32 %v1374, %v1377
        %vm1379 = vweird.f32 %v1328
        %vm1380 = vweird.f32 %v1374
        %vm1381 = vmor %vm1379, %vm1380
        %v1382 = vsel %vm1381, %v1374, %v1378
        %v1383 = vand.u32 2147483647, %v1328
        %vm1384 = vcmp.eq.f32.partialorder %v1383, 8.507059e+37
        %v1385 = vand.u32 %v1328, 2147483648
        %v1386 = vor.u32 1.1754944e-38, %v1385
        %v1387 = vsel %vm1384, %v1386, %v1382
        %v1388 = vmul.f32 1.0, %v1387
        %v1389 = vrcp.pop %v1329
        %v1390 = vmul.f32 %v1329, %v1389
        %v1391 = vsub.f32 1.0, %v1390
        %v1392 = vmul.f32 %v1389, %v1391
        %v1393 = vadd.f32 %v1389, %v1392
        %vm1394 = vweird.f32 %v1329
        %vm1395 = vweird.f32 %v1389
        %vm1396 = vmor %vm1394, %vm1395
        %v1397 = vsel %vm1396, %v1389, %v1393
        %v1398 = vand.u32 2147483647, %v1329
        %vm1399 = vcmp.eq.f32.partialorder %v1398, 8.507059e+37
        %v1400 = vand.u32 %v1329, 2147483648
        %v1401 = vor.u32 1.1754944e-38, %v1400
        %v1402 = vsel %vm1399, %v1401, %v1397
        %v1403 = vmul.f32 1.0, %v1402
        %v1404 = vrcp.pop %v1330
        %v1405 = vmul.f32 %v1330, %v1404
        %v1406 = vsub.f32 1.0, %v1405
        %v1407 = vmul.f32 %v1404, %v1406
        %v1408 = vadd.f32 %v1404, %v1407
        %vm1409 = vweird.f32 %v1330
        %vm1410 = vweird.f32 %v1404
        %vm1411 = vmor %vm1409, %vm1410
        %v1412 = vsel %vm1411, %v1404, %v1408
        %v1413 = vand.u32 2147483647, %v1330
        %vm1414 = vcmp.eq.f32.partialorder %v1413, 8.507059e+37
        %v1415 = vand.u32 %v1330, 2147483648
        %v1416 = vor.u32 1.1754944e-38, %v1415
        %v1417 = vsel %vm1414, %v1416, %v1412
        %v1418 = vmul.f32 1.0, %v1417
        %v1419 = vrcp.pop %v1331
        %v1420 = vmul.f32 %v1331, %v1419
        %v1421 = vsub.f32 1.0, %v1420
        %v1422 = vmul.f32 %v1419, %v1421
        %v1423 = vadd.f32 %v1419, %v1422
        %vm1424 = vweird.f32 %v1331
        %vm1425 = vweird.f32 %v1419
        %vm1426 = vmor %vm1424, %vm1425
        %v1427 = vsel %vm1426, %v1419, %v1423
        %v1428 = vand.u32 2147483647, %v1331
        %vm1429 = vcmp.eq.f32.partialorder %v1428, 8.507059e+37
        %v1430 = vand.u32 %v1331, 2147483648
        %v1431 = vor.u32 1.1754944e-38, %v1430
        %v1432 = vsel %vm1429, %v1431, %v1427
        %v1433 = vmul.f32 1.0, %v1432
        %v1434 = vrcp.pop %v1332
        %v1435 = vmul.f32 %v1332, %v1434
        %v1436 = vsub.f32 1.0, %v1435
        %v1437 = vmul.f32 %v1434, %v1436
        %v1438 = vadd.f32 %v1434, %v1437
        %vm1439 = vweird.f32 %v1332
        %vm1440 = vweird.f32 %v1434
        %vm1441 = vmor %vm1439, %vm1440
        %v1442 = vsel %vm1441, %v1434, %v1438
        %v1443 = vand.u32 2147483647, %v1332
        %vm1444 = vcmp.eq.f32.partialorder %v1443, 8.507059e+37
        %v1445 = vand.u32 %v1332, 2147483648
        %v1446 = vor.u32 1.1754944e-38, %v1445
        %v1447 = vsel %vm1444, %v1446, %v1442
        %v1448 = vmul.f32 1.0, %v1447
        %v1449 = vrcp.pop %v1333
        %v1450 = vmul.f32 %v1333, %v1449
        %v1451 = vsub.f32 1.0, %v1450
        %v1452 = vmul.f32 %v1449, %v1451
        %v1453 = vadd.f32 %v1449, %v1452
        %vm1454 = vweird.f32 %v1333
        %vm1455 = vweird.f32 %v1449
        %vm1456 = vmor %vm1454, %vm1455
        %v1457 = vsel %vm1456, %v1449, %v1453
        %v1458 = vand.u32 2147483647, %v1333
        %vm1459 = vcmp.eq.f32.partialorder %v1458, 8.507059e+37
        %v1460 = vand.u32 %v1333, 2147483648
        %v1461 = vor.u32 1.1754944e-38, %v1460
        %v1462 = vsel %vm1459, %v1461, %v1457
        %v1463 = vmul.f32 1.0, %v1462
        %v1464 = vrcp.pop %v1334
        %v1465 = vmul.f32 %v1334, %v1464
        %v1466 = vsub.f32 1.0, %v1465
        %v1467 = vmul.f32 %v1464, %v1466
        %v1468 = vadd.f32 %v1464, %v1467
        %vm1469 = vweird.f32 %v1334
        %vm1470 = vweird.f32 %v1464
        %vm1471 = vmor %vm1469, %vm1470
        %v1472 = vsel %vm1471, %v1464, %v1468
        %v1473 = vand.u32 2147483647, %v1334
        %vm1474 = vcmp.eq.f32.partialorder %v1473, 8.507059e+37
        %v1475 = vand.u32 %v1334, 2147483648
        %v1476 = vor.u32 1.1754944e-38, %v1475
        %v1477 = vsel %vm1474, %v1476, %v1472
        %v1478 = vmul.f32 1.0, %v1477
        %v1479 = vrcp.pop %v1335
        %v1480 = vmul.f32 %v1335, %v1479
        %v1481 = vsub.f32 1.0, %v1480
        %v1482 = vmul.f32 %v1479, %v1481
        %v1483 = vadd.f32 %v1479, %v1482
        %vm1484 = vweird.f32 %v1335
        %vm1485 = vweird.f32 %v1479
        %vm1486 = vmor %vm1484, %vm1485
        %v1487 = vsel %vm1486, %v1479, %v1483
        %v1488 = vand.u32 2147483647, %v1335
        %vm1489 = vcmp.eq.f32.partialorder %v1488, 8.507059e+37
        %v1490 = vand.u32 %v1335, 2147483648
        %v1491 = vor.u32 1.1754944e-38, %v1490
        %v1492 = vsel %vm1489, %v1491, %v1487
        %v1493 = vmul.f32 1.0, %v1492
        %v1494 = vrcp.pop %v1336
        %v1495 = vmul.f32 %v1336, %v1494
        %v1496 = vsub.f32 1.0, %v1495
        %v1497 = vmul.f32 %v1494, %v1496
        %v1498 = vadd.f32 %v1494, %v1497
        %vm1499 = vweird.f32 %v1336
        %vm1500 = vweird.f32 %v1494
        %vm1501 = vmor %vm1499, %vm1500
        %v1502 = vsel %vm1501, %v1494, %v1498
        %v1503 = vand.u32 2147483647, %v1336
        %vm1504 = vcmp.eq.f32.partialorder %v1503, 8.507059e+37
        %v1505 = vand.u32 %v1336, 2147483648
        %v1506 = vor.u32 1.1754944e-38, %v1505
        %v1507 = vsel %vm1504, %v1506, %v1502
        %v1508 = vmul.f32 1.0, %v1507
        %v1509 = vrcp.pop %v1337
        %v1510 = vmul.f32 %v1337, %v1509
        %v1511 = vsub.f32 1.0, %v1510
        %v1512 = vmul.f32 %v1509, %v1511
        %v1513 = vadd.f32 %v1509, %v1512
        %vm1514 = vweird.f32 %v1337
        %vm1515 = vweird.f32 %v1509
        %vm1516 = vmor %vm1514, %vm1515
        %v1517 = vsel %vm1516, %v1509, %v1513
        %v1518 = vand.u32 2147483647, %v1337
        %vm1519 = vcmp.eq.f32.partialorder %v1518, 8.507059e+37
        %v1520 = vand.u32 %v1337, 2147483648
        %v1521 = vor.u32 1.1754944e-38, %v1520
        %v1522 = vsel %vm1519, %v1521, %v1517
        %v1523 = vmul.f32 1.0, %v1522
        %v1524 = vrcp.pop %v1338
        %v1525 = vmul.f32 %v1338, %v1524
        %v1526 = vsub.f32 1.0, %v1525
        %v1527 = vmul.f32 %v1524, %v1526
        %v1528 = vadd.f32 %v1524, %v1527
        %vm1529 = vweird.f32 %v1338
        %vm1530 = vweird.f32 %v1524
        %vm1531 = vmor %vm1529, %vm1530
        %v1532 = vsel %vm1531, %v1524, %v1528
        %v1533 = vand.u32 2147483647, %v1338
        %vm1534 = vcmp.eq.f32.partialorder %v1533, 8.507059e+37
        %v1535 = vand.u32 %v1338, 2147483648
        %v1536 = vor.u32 1.1754944e-38, %v1535
        %v1537 = vsel %vm1534, %v1536, %v1532
        %v1538 = vmul.f32 1.0, %v1537
        %v1539 = vrcp.pop %v1339
        %v1540 = vmul.f32 %v1339, %v1539
        %v1541 = vsub.f32 1.0, %v1540
        %v1542 = vmul.f32 %v1539, %v1541
        %v1543 = vadd.f32 %v1539, %v1542
        %vm1544 = vweird.f32 %v1339
        %vm1545 = vweird.f32 %v1539
        %vm1546 = vmor %vm1544, %vm1545
        %v1547 = vsel %vm1546, %v1539, %v1543
        %v1548 = vand.u32 2147483647, %v1339
        %vm1549 = vcmp.eq.f32.partialorder %v1548, 8.507059e+37
        %v1550 = vand.u32 %v1339, 2147483648
        %v1551 = vor.u32 1.1754944e-38, %v1550
        %v1552 = vsel %vm1549, %v1551, %v1547
        %v1553 = vmul.f32 1.0, %v1552
        %v1554 = vrcp.pop %v1340
        %v1555 = vmul.f32 %v1340, %v1554
        %v1556 = vsub.f32 1.0, %v1555
        %v1557 = vmul.f32 %v1554, %v1556
        %v1558 = vadd.f32 %v1554, %v1557
        %vm1559 = vweird.f32 %v1340
        %vm1560 = vweird.f32 %v1554
        %vm1561 = vmor %vm1559, %vm1560
        %v1562 = vsel %vm1561, %v1554, %v1558
        %v1563 = vand.u32 2147483647, %v1340
        %vm1564 = vcmp.eq.f32.partialorder %v1563, 8.507059e+37
        %v1565 = vand.u32 %v1340, 2147483648
        %v1566 = vor.u32 1.1754944e-38, %v1565
        %v1567 = vsel %vm1564, %v1566, %v1562
        %v1568 = vmul.f32 1.0, %v1567
        %v1569 = vrcp.pop %v1341
        %v1570 = vmul.f32 %v1341, %v1569
        %v1571 = vsub.f32 1.0, %v1570
        %v1572 = vmul.f32 %v1569, %v1571
        %v1573 = vadd.f32 %v1569, %v1572
        %vm1574 = vweird.f32 %v1341
        %vm1575 = vweird.f32 %v1569
        %vm1576 = vmor %vm1574, %vm1575
        %v1577 = vsel %vm1576, %v1569, %v1573
        %v1578 = vand.u32 2147483647, %v1341
        %vm1579 = vcmp.eq.f32.partialorder %v1578, 8.507059e+37
        %v1580 = vand.u32 %v1341, 2147483648
        %v1581 = vor.u32 1.1754944e-38, %v1580
        %v1582 = vsel %vm1579, %v1581, %v1577
        %v1583 = vmul.f32 1.0, %v1582
        %v1584 = vrcp.pop %v1342
        %v1585 = vmul.f32 %v1342, %v1584
        %v1586 = vsub.f32 1.0, %v1585
        %v1587 = vmul.f32 %v1584, %v1586
        %v1588 = vadd.f32 %v1584, %v1587
        %vm1589 = vweird.f32 %v1342
        %vm1590 = vweird.f32 %v1584
        %vm1591 = vmor %vm1589, %vm1590
        %v1592 = vsel %vm1591, %v1584, %v1588
        %v1593 = vand.u32 2147483647, %v1342
        %vm1594 = vcmp.eq.f32.partialorder %v1593, 8.507059e+37
        %v1595 = vand.u32 %v1342, 2147483648
        %v1596 = vor.u32 1.1754944e-38, %v1595
        %v1597 = vsel %vm1594, %v1596, %v1592
        %v1598 = vmul.f32 1.0, %v1597
        %v1599 = vrcp.pop %v1343
        %v1600 = vmul.f32 %v1343, %v1599
        %v1601 = vsub.f32 1.0, %v1600
        %v1602 = vmul.f32 %v1599, %v1601
        %v1603 = vadd.f32 %v1599, %v1602
        %vm1604 = vweird.f32 %v1343
        %vm1605 = vweird.f32 %v1599
        %vm1606 = vmor %vm1604, %vm1605
        %v1607 = vsel %vm1606, %v1599, %v1603
        %v1608 = vand.u32 2147483647, %v1343
        %vm1609 = vcmp.eq.f32.partialorder %v1608, 8.507059e+37
        %v1610 = vand.u32 %v1343, 2147483648
        %v1611 = vor.u32 1.1754944e-38, %v1610
        %v1612 = vsel %vm1609, %v1611, %v1607
        %v1613 = vmul.f32 1.0, %v1612
        %v1614 = vmul.f32 %v1254, %v1358
        %v1615 = vmul.f32 %v1255, %v1373
        %v1616 = vmul.f32 %v1256, %v1388
        %v1617 = vmul.f32 %v1257, %v1403
        %v1618 = vmul.f32 %v1258, %v1418
        %v1619 = vmul.f32 %v1259, %v1433
        %v1620 = vmul.f32 %v1260, %v1448
        %v1621 = vmul.f32 %v1261, %v1463
        %v1622 = vmul.f32 %v1262, %v1478
        %v1623 = vmul.f32 %v1263, %v1493
        %v1624 = vmul.f32 %v1264, %v1508
        %v1625 = vmul.f32 %v1265, %v1523
        %v1626 = vmul.f32 %v1266, %v1538
        %v1627 = vmul.f32 %v1267, %v1553
        %v1628 = vmul.f32 %v1268, %v1568
        %v1629 = vmul.f32 %v1269, %v1583
        %v1630 = vmul.f32 %v1270, %v1598
        %v1631 = vmul.f32 %v1271, %v1613
        %v1632 = vmul.f32 %v1614, %v723
        %v1633 = vmul.f32 %v1615, %v724
        %v1634 = vmul.f32 %v1616, %v723
        %v1635 = vmul.f32 %v1617, %v724
        %v1636 = vmul.f32 %v1618, %v723
        %v1637 = vmul.f32 %v1619, %v724
        %v1638 = vmul.f32 %v1620, %v723
        %v1639 = vmul.f32 %v1621, %v724
        %v1640 = vmul.f32 %v1622, %v723
        %v1641 = vmul.f32 %v1623, %v724
        %v1642 = vmul.f32 %v1624, %v723
        %v1643 = vmul.f32 %v1625, %v724
        %v1644 = vmul.f32 %v1626, %v723
        %v1645 = vmul.f32 %v1627, %v724
        %v1646 = vmul.f32 %v1628, %v723
        %v1647 = vmul.f32 %v1629, %v724
        %v1648 = vmul.f32 %v1630, %v723
        %v1649 = vmul.f32 %v1631, %v724
        %v1650 = vpack.c.bf16 %v1632, %v1632
        %v1651 = vpack.c.bf16 %v1633, %v1633
        %v1652 = vpack.c.bf16 %v1634, %v1634
        %v1653 = vpack.c.bf16 %v1635, %v1635
        %v1654 = vpack.c.bf16 %v1636, %v1636
        %v1655 = vpack.c.bf16 %v1637, %v1637
        %v1656 = vpack.c.bf16 %v1638, %v1638
        %v1657 = vpack.c.bf16 %v1639, %v1639
        %v1658 = vpack.c.bf16 %v1640, %v1640
        %v1659 = vpack.c.bf16 %v1641, %v1641
        %v1660 = vpack.c.bf16 %v1642, %v1642
        %v1661 = vpack.c.bf16 %v1643, %v1643
        %v1662 = vpack.c.bf16 %v1644, %v1644
        %v1663 = vpack.c.bf16 %v1645, %v1645
        %v1664 = vpack.c.bf16 %v1646, %v1646
        %v1665 = vpack.c.bf16 %v1647, %v1647
        %v1666 = vpack.c.bf16 %v1648, %v1648
        %v1667 = vpack.c.bf16 %v1649, %v1649
        %1668 = vst [vmem:[#allocation3] sm:$0xf] %v1650
        %v1669 = vld [vmem:[#allocation3 + $0x4] sm:$0x1]
        %v1670 = vsel %vm1164, %v1651, %v1669
        %1671 = vst [vmem:[#allocation3 + $0x4] sm:$0x1] %v1670
        %1672 = vst [vmem:[#allocation3 + $0x8] sm:$0xf] %v1652
        %v1673 = vld [vmem:[#allocation3 + $0xc] sm:$0x1]
        %v1674 = vsel %vm1164, %v1653, %v1673
        %1675 = vst [vmem:[#allocation3 + $0xc] sm:$0x1] %v1674
        %1676 = vst [vmem:[#allocation3 + $0x10] sm:$0xf] %v1654
        %v1677 = vld [vmem:[#allocation3 + $0x14] sm:$0x1]
        %v1678 = vsel %vm1164, %v1655, %v1677
        %1679 = vst [vmem:[#allocation3 + $0x14] sm:$0x1] %v1678
        %1680 = vst [vmem:[#allocation3 + $0x18] sm:$0xf] %v1656
        %v1681 = vld [vmem:[#allocation3 + $0x1c] sm:$0x1]
        %v1682 = vsel %vm1164, %v1657, %v1681
        %1683 = vst [vmem:[#allocation3 + $0x1c] sm:$0x1] %v1682
        %1684 = vst [vmem:[#allocation3 + $0x20] sm:$0xf] %v1658
        %v1685 = vld [vmem:[#allocation3 + $0x24] sm:$0x1]
        %v1686 = vsel %vm1164, %v1659, %v1685
        %1687 = vst [vmem:[#allocation3 + $0x24] sm:$0x1] %v1686
        %1688 = vst [vmem:[#allocation3 + $0x28] sm:$0xf] %v1660
        %v1689 = vld [vmem:[#allocation3 + $0x2c] sm:$0x1]
        %v1690 = vsel %vm1164, %v1661, %v1689
        %1691 = vst [vmem:[#allocation3 + $0x2c] sm:$0x1] %v1690
        %1692 = vst [vmem:[#allocation3 + $0x30] sm:$0xf] %v1662
        %v1693 = vld [vmem:[#allocation3 + $0x34] sm:$0x1]
        %v1694 = vsel %vm1164, %v1663, %v1693
        %1695 = vst [vmem:[#allocation3 + $0x34] sm:$0x1] %v1694
        %1696 = vst [vmem:[#allocation3 + $0x38] sm:$0xf] %v1664
        %v1697 = vld [vmem:[#allocation3 + $0x3c] sm:$0x1]
        %v1698 = vsel %vm1164, %v1665, %v1697
        %1699 = vst [vmem:[#allocation3 + $0x3c] sm:$0x1] %v1698
        %1700 = vst [vmem:[#allocation3 + $0x40] sm:$0xf] %v1666
        %v1701 = vld [vmem:[#allocation3 + $0x44] sm:$0x1]
        %v1702 = vsel %vm1164, %v1667, %v1701
        %1703 = vst [vmem:[#allocation3 + $0x44] sm:$0x1] %v1702
        %1704 = vst [vmem:[#allocation2] sm:$0xf] 0
        %v1705 = vld [vmem:[#allocation2 + $0x4] sm:$0x1]
        %v1706 = vsel %vm1164, 0, %v1705
        %1707 = vst [vmem:[#allocation2 + $0x4] sm:$0x1] %v1706
        %v1708 = vld [vmem:[#allocation2] sm:$0xf]
        %v1709 = vld [vmem:[#allocation2 + $0x8] sm:$0xf]
        %v1710 = vld [vmem:[#allocation2 + $0x10] sm:$0xf]
        %v1711 = vld [vmem:[#allocation2 + $0x18] sm:$0xf]
        %v1712 = vld [vmem:[#allocation2 + $0x20] sm:$0xf]
        %v1713 = vld [vmem:[#allocation2 + $0x28] sm:$0xf]
        %v1714 = vld [vmem:[#allocation2 + $0x30] sm:$0xf]
        %v1715 = vld [vmem:[#allocation2 + $0x38] sm:$0xf]
        %v1716 = vld [vmem:[%s6] sm:$0xf]
        %v1717 = vld [vmem:[%s6 + $0x4] sm:$0xf]
        %v1718 = vld [vmem:[%s6 + $0x8] sm:$0xf]
        %v1719 = vld [vmem:[%s6 + $0xc] sm:$0xf]
        %v1720 = vld [vmem:[%s6 + $0x10] sm:$0xf]
        %v1721 = vld [vmem:[%s6 + $0x14] sm:$0xf]
        %v1722 = vld [vmem:[%s6 + $0x18] sm:$0xf]
        %v1723 = vld [vmem:[%s6 + $0x1c] sm:$0xf]
        %v1724 = vld [vmem:[%s6 + $0x20] sm:$0xf]
        %v1725 = vld [vmem:[%s6 + $0x24] sm:$0xf]
        %v1726 = vld [vmem:[%s6 + $0x28] sm:$0xf]
        %v1727 = vld [vmem:[%s6 + $0x2c] sm:$0xf]
        %v1728 = vld [vmem:[%s6 + $0x30] sm:$0xf]
        %v1729 = vld [vmem:[%s6 + $0x34] sm:$0xf]
        %v1730 = vld [vmem:[%s6 + $0x38] sm:$0xf]
        %v1731 = vld [vmem:[%s6 + $0x3c] sm:$0xf]
        %v1732 = vld [vmem:[#allocation2 + $0x4] sm:$0x1]
        %v1733 = vld [vmem:[#allocation2 + $0xc] sm:$0x1]
        %v1734 = vld [vmem:[#allocation2 + $0x14] sm:$0x1]
        %v1735 = vld [vmem:[#allocation2 + $0x1c] sm:$0x1]
        %v1736 = vld [vmem:[#allocation2 + $0x24] sm:$0x1]
        %v1737 = vld [vmem:[#allocation2 + $0x2c] sm:$0x1]
        %v1738 = vld [vmem:[#allocation2 + $0x34] sm:$0x1]
        %v1739 = vld [vmem:[#allocation2 + $0x3c] sm:$0x1]
        %vm1740 = vsmask.f32 3328
        %vm1741 = vsmask.f32 7440
        %vm1742 = vmor %vm1740, %vm1741
        %v1744 = vshrl.u32 %v1708, 16
        %v1746 = vrot.slane %v1744, 4
        %v1747 = vshll.u32 %v1708, 16
        %v1749 = vrot.slane %v1747, 5
        %v1750 = vor.u32 %v1746, %v1749
        %v1751 = vrot.slane %v1750, 4
        %v1753 = vshll.u32 %v1732, 16
        %v1755 = vrot.slane %v1753, 5
        %v1756 = vsel %vm1742, %v1751, %v1755
        %v1758 = vshrl.u32 %v1709, 16
        %v1760 = vrot.slane %v1758, 4
        %v1761 = vshll.u32 %v1709, 16
        %v1763 = vrot.slane %v1761, 5
        %v1764 = vor.u32 %v1760, %v1763
        %v1765 = vrot.slane %v1764, 4
        %v1767 = vshll.u32 %v1733, 16
        %v1769 = vrot.slane %v1767, 5
        %v1770 = vsel %vm1742, %v1765, %v1769
        %v1772 = vshrl.u32 %v1710, 16
        %v1774 = vrot.slane %v1772, 4
        %v1775 = vshll.u32 %v1710, 16
        %v1777 = vrot.slane %v1775, 5
        %v1778 = vor.u32 %v1774, %v1777
        %v1779 = vrot.slane %v1778, 4
        %v1781 = vshll.u32 %v1734, 16
        %v1783 = vrot.slane %v1781, 5
        %v1784 = vsel %vm1742, %v1779, %v1783
        %v1786 = vshrl.u32 %v1711, 16
        %v1788 = vrot.slane %v1786, 4
        %v1789 = vshll.u32 %v1711, 16
        %v1791 = vrot.slane %v1789, 5
        %v1792 = vor.u32 %v1788, %v1791
        %v1793 = vrot.slane %v1792, 4
        %v1795 = vshll.u32 %v1735, 16
        %v1797 = vrot.slane %v1795, 5
        %v1798 = vsel %vm1742, %v1793, %v1797
        %v1800 = vshrl.u32 %v1712, 16
        %v1802 = vrot.slane %v1800, 4
        %v1803 = vshll.u32 %v1712, 16
        %v1805 = vrot.slane %v1803, 5
        %v1806 = vor.u32 %v1802, %v1805
        %v1807 = vrot.slane %v1806, 4
        %v1809 = vshll.u32 %v1736, 16
        %v1811 = vrot.slane %v1809, 5
        %v1812 = vsel %vm1742, %v1807, %v1811
        %v1814 = vshrl.u32 %v1713, 16
        %v1816 = vrot.slane %v1814, 4
        %v1817 = vshll.u32 %v1713, 16
        %v1819 = vrot.slane %v1817, 5
        %v1820 = vor.u32 %v1816, %v1819
        %v1821 = vrot.slane %v1820, 4
        %v1823 = vshll.u32 %v1737, 16
        %v1825 = vrot.slane %v1823, 5
        %v1826 = vsel %vm1742, %v1821, %v1825
        %v1828 = vshrl.u32 %v1714, 16
        %v1830 = vrot.slane %v1828, 4
        %v1831 = vshll.u32 %v1714, 16
        %v1833 = vrot.slane %v1831, 5
        %v1834 = vor.u32 %v1830, %v1833
        %v1835 = vrot.slane %v1834, 4
        %v1837 = vshll.u32 %v1738, 16
        %v1839 = vrot.slane %v1837, 5
        %v1840 = vsel %vm1742, %v1835, %v1839
        %v1842 = vshrl.u32 %v1715, 16
        %v1844 = vrot.slane %v1842, 4
        %v1845 = vshll.u32 %v1715, 16
        %v1847 = vrot.slane %v1845, 5
        %v1848 = vor.u32 %v1844, %v1847
        %v1849 = vrot.slane %v1848, 4
        %v1851 = vshll.u32 %v1739, 16
        %v1853 = vrot.slane %v1851, 5
        %v1854 = vsel %vm1742, %v1849, %v1853
        %v1855 = vld [vmem:[%s7] sm:$0xf]
        %v1856 = vld [vmem:[%s7 + $0x4] sm:$0xf]
        %v1857 = vld [vmem:[%s7 + $0x8] sm:$0xf]
        %v1858 = vld [vmem:[%s7 + $0xc] sm:$0xf]
        %v1859 = vld [vmem:[%s7 + $0x10] sm:$0xf]
        %v1860 = vld [vmem:[%s7 + $0x14] sm:$0xf]
        %v1861 = vld [vmem:[%s7 + $0x18] sm:$0xf]
        %v1862 = vld [vmem:[%s7 + $0x1c] sm:$0xf]
        %v1863 = vunpack.c.l.b16 %v1756
        %v1864 = vunpack.c.l.b16 %v1770
        %v1865 = vunpack.c.l.b16 %v1784
        %v1866 = vunpack.c.l.b16 %v1798
        %v1867 = vunpack.c.l.b16 %v1812
        %v1868 = vunpack.c.l.b16 %v1826
        %v1869 = vunpack.c.l.b16 %v1840
        %v1870 = vunpack.c.l.b16 %v1854
        %v1871 = vpack.c.b16 %v1864, %v1863
        %v1872 = vpack.c.b16 %v1866, %v1865
        %v1873 = vpack.c.b16 %v1868, %v1867
        %v1874 = vpack.c.b16 %v1870, %v1869
        %v1883 = vunpack.c.l.b16 %v1855
        %v1884 = vunpack.c.l.b16 %v1856
        %v1885 = vunpack.c.l.b16 %v1857
        %v1886 = vunpack.c.l.b16 %v1858
        %v1887 = vunpack.c.l.b16 %v1859
        %v1888 = vunpack.c.l.b16 %v1860
        %v1889 = vunpack.c.l.b16 %v1861
        %v1890 = vunpack.c.l.b16 %v1862
        %v1891 = vpack.c.b16 %v1884, %v1883
        %v1892 = vpack.c.b16 %v1886, %v1885
        %v1893 = vpack.c.b16 %v1888, %v1887
        %v1894 = vpack.c.b16 %v1890, %v1889
        %vm1899 = vcmask 523264
        %v1901 = vsel %vm1899, %v1871, 0
        %v1904 = vsel %vm1899, %v1872, 0
        %v1907 = vsel %vm1899, %v1873, 0
        %v1910 = vsel %vm1899, %v1874, 0
        %1912 = vmatpush.bf16.msra.mxu0 0
        %1913 = vmatpush.bf16.msra.mxu0 0
        %1914 = vmatpush.bf16.msra.mxu0 0
        %1915 = vmatpush.bf16.msra.mxu0 0
        %1916 = vmatpush.bf16.msra.mxu0 %v1894
        %1917 = vmatpush.bf16.msra.mxu0 %v1893
        %1918 = vmatpush.bf16.msra.mxu0 %v1892
        %1919 = vmatpush.bf16.msra.mxu0 %v1891
        %1920 = vmatmul.bf16.gmra.mxu0 %v1901
        %v1921 = vpop.f32.mrf.mxu0
        %v1922 = vadd.f32 0.0, %v1921
        %v1923 = vpop.f32.mrf.mxu0
        %v1924 = vadd.f32 0.0, %v1923
        %1925 = vmatmul.bf16.gmra.mxu0 %v1904
        %v1926 = vpop.f32.mrf.mxu0
        %v1927 = vadd.f32 0.0, %v1926
        %v1928 = vpop.f32.mrf.mxu0
        %v1929 = vadd.f32 0.0, %v1928
        %1930 = vmatmul.bf16.gmra.mxu0 %v1907
        %v1931 = vpop.f32.mrf.mxu0
        %v1932 = vadd.f32 0.0, %v1931
        %v1933 = vpop.f32.mrf.mxu0
        %v1934 = vadd.f32 0.0, %v1933
        %1935 = vmatmul.bf16.gmra.mxu0 %v1910
        %v1936 = vpop.f32.mrf.mxu0
        %v1937 = vadd.f32 0.0, %v1936
        %v1938 = vpop.f32.mrf.mxu0
        %v1939 = vadd.f32 0.0, %v1938
        %1940 = vdwg.mxu0
        %v1949 = vunpack.c.l.b16 %v1708
        %v1950 = vunpack.c.l.b16 %v1709
        %v1951 = vunpack.c.l.b16 %v1710
        %v1952 = vunpack.c.l.b16 %v1711
        %v1953 = vunpack.c.l.b16 %v1712
        %v1954 = vunpack.c.l.b16 %v1713
        %v1955 = vunpack.c.l.b16 %v1714
        %v1956 = vunpack.c.l.b16 %v1715
        %v1957 = vpack.c.b16 %v1950, %v1949
        %v1958 = vpack.c.b16 %v1952, %v1951
        %v1959 = vpack.c.b16 %v1954, %v1953
        %v1960 = vpack.c.b16 %v1956, %v1955
        %v1981 = vunpack.c.l.b16 %v1716
        %v1982 = vunpack.c.l.b16 %v1717
        %v1983 = vunpack.c.l.b16 %v1718
        %v1984 = vunpack.c.l.b16 %v1719
        %v1985 = vunpack.c.l.b16 %v1720
        %v1986 = vunpack.c.l.b16 %v1721
        %v1987 = vunpack.c.l.b16 %v1722
        %v1988 = vunpack.c.l.b16 %v1723
        %v1989 = vunpack.c.l.b16 %v1724
        %v1990 = vunpack.c.l.b16 %v1725
        %v1991 = vunpack.c.l.b16 %v1726
        %v1992 = vunpack.c.l.b16 %v1727
        %v1993 = vunpack.c.l.b16 %v1728
        %v1994 = vunpack.c.l.b16 %v1729
        %v1995 = vunpack.c.l.b16 %v1730
        %v1996 = vunpack.c.l.b16 %v1731
        %v1997 = vpack.c.b16 %v1982, %v1981
        %v1998 = vpack.c.b16 %v1984, %v1983
        %v1999 = vpack.c.b16 %v1986, %v1985
        %v2000 = vpack.c.b16 %v1988, %v1987
        %v2001 = vpack.c.b16 %v1990, %v1989
        %v2002 = vpack.c.b16 %v1992, %v1991
        %v2003 = vpack.c.b16 %v1994, %v1993
        %v2004 = vpack.c.b16 %v1996, %v1995
        %2013 = vmatpush.bf16.msra.mxu0 %v2004
        %2014 = vmatpush.bf16.msra.mxu0 %v2003
        %2015 = vmatpush.bf16.msra.mxu0 %v2002
        %2016 = vmatpush.bf16.msra.mxu0 %v2001
        %2017 = vmatpush.bf16.msra.mxu0 %v2000
        %2018 = vmatpush.bf16.msra.mxu0 %v1999
        %2019 = vmatpush.bf16.msra.mxu0 %v1998
        %2020 = vmatpush.bf16.msra.mxu0 %v1997
        %2021 = vmatmul.bf16.gmra.mxu0 %v1957
        %v2022 = vpop.f32.mrf.mxu0
        %v2023 = vadd.f32 %v1922, %v2022
        %v2024 = vpop.f32.mrf.mxu0
        %v2025 = vadd.f32 %v1924, %v2024
        %2026 = vmatmul.bf16.gmra.mxu0 %v1958
        %v2027 = vpop.f32.mrf.mxu0
        %v2028 = vadd.f32 %v1927, %v2027
        %v2029 = vpop.f32.mrf.mxu0
        %v2030 = vadd.f32 %v1929, %v2029
        %2031 = vmatmul.bf16.gmra.mxu0 %v1959
        %v2032 = vpop.f32.mrf.mxu0
        %v2033 = vadd.f32 %v1932, %v2032
        %v2034 = vpop.f32.mrf.mxu0
        %v2035 = vadd.f32 %v1934, %v2034
        %2036 = vmatmul.bf16.gmra.mxu0 %v1960
        %v2037 = vpop.f32.mrf.mxu0
        %v2038 = vadd.f32 %v1937, %v2037
        %v2039 = vpop.f32.mrf.mxu0
        %v2040 = vadd.f32 %v1939, %v2039
        %2041 = vdwg.mxu0
        %v2042 = vld [vmem:[#allocation3] sm:$0xf]
        %v2043 = vld [vmem:[#allocation3 + $0x8] sm:$0xf]
        %v2044 = vld [vmem:[#allocation3 + $0x10] sm:$0xf]
        %v2045 = vld [vmem:[#allocation3 + $0x18] sm:$0xf]
        %v2046 = vld [vmem:[#allocation3 + $0x20] sm:$0xf]
        %v2047 = vld [vmem:[#allocation3 + $0x28] sm:$0xf]
        %v2048 = vld [vmem:[#allocation3 + $0x30] sm:$0xf]
        %v2049 = vld [vmem:[#allocation3 + $0x38] sm:$0xf]
        %s2050 = scalar_lea.vmem %s6, 64
        %v2051 = vld [vmem:[%s2050] sm:$0xf]
        %v2052 = vld [vmem:[%s2050 + $0x4] sm:$0xf]
        %v2053 = vld [vmem:[%s2050 + $0x8] sm:$0xf]
        %v2054 = vld [vmem:[%s2050 + $0xc] sm:$0xf]
        %v2055 = vld [vmem:[%s2050 + $0x10] sm:$0xf]
        %v2056 = vld [vmem:[%s2050 + $0x14] sm:$0xf]
        %v2057 = vld [vmem:[%s2050 + $0x18] sm:$0xf]
        %v2058 = vld [vmem:[%s2050 + $0x1c] sm:$0xf]
        %v2059 = vld [vmem:[%s2050 + $0x20] sm:$0xf]
        %v2060 = vld [vmem:[%s2050 + $0x24] sm:$0xf]
        %v2061 = vld [vmem:[%s2050 + $0x28] sm:$0xf]
        %v2062 = vld [vmem:[%s2050 + $0x2c] sm:$0xf]
        %v2063 = vld [vmem:[%s2050 + $0x30] sm:$0xf]
        %v2064 = vld [vmem:[%s2050 + $0x34] sm:$0xf]
        %v2065 = vld [vmem:[%s2050 + $0x38] sm:$0xf]
        %v2066 = vld [vmem:[%s2050 + $0x3c] sm:$0xf]
        %v2075 = vunpack.c.l.b16 %v2042
        %v2076 = vunpack.c.l.b16 %v2043
        %v2077 = vunpack.c.l.b16 %v2044
        %v2078 = vunpack.c.l.b16 %v2045
        %v2079 = vunpack.c.l.b16 %v2046
        %v2080 = vunpack.c.l.b16 %v2047
        %v2081 = vunpack.c.l.b16 %v2048
        %v2082 = vunpack.c.l.b16 %v2049
        %v2083 = vpack.c.b16 %v2076, %v2075
        %v2084 = vpack.c.b16 %v2078, %v2077
        %v2085 = vpack.c.b16 %v2080, %v2079
        %v2086 = vpack.c.b16 %v2082, %v2081
        %v2107 = vunpack.c.l.b16 %v2051
        %v2108 = vunpack.c.l.b16 %v2052
        %v2109 = vunpack.c.l.b16 %v2053
        %v2110 = vunpack.c.l.b16 %v2054
        %v2111 = vunpack.c.l.b16 %v2055
        %v2112 = vunpack.c.l.b16 %v2056
        %v2113 = vunpack.c.l.b16 %v2057
        %v2114 = vunpack.c.l.b16 %v2058
        %v2115 = vunpack.c.l.b16 %v2059
        %v2116 = vunpack.c.l.b16 %v2060
        %v2117 = vunpack.c.l.b16 %v2061
        %v2118 = vunpack.c.l.b16 %v2062
        %v2119 = vunpack.c.l.b16 %v2063
        %v2120 = vunpack.c.l.b16 %v2064
        %v2121 = vunpack.c.l.b16 %v2065
        %v2122 = vunpack.c.l.b16 %v2066
        %v2123 = vpack.c.b16 %v2108, %v2107
        %v2124 = vpack.c.b16 %v2110, %v2109
        %v2125 = vpack.c.b16 %v2112, %v2111
        %v2126 = vpack.c.b16 %v2114, %v2113
        %v2127 = vpack.c.b16 %v2116, %v2115
        %v2128 = vpack.c.b16 %v2118, %v2117
        %v2129 = vpack.c.b16 %v2120, %v2119
        %v2130 = vpack.c.b16 %v2122, %v2121
        %2139 = vmatpush.bf16.msra.mxu0 %v2130
        %2140 = vmatpush.bf16.msra.mxu0 %v2129
        %2141 = vmatpush.bf16.msra.mxu0 %v2128
        %2142 = vmatpush.bf16.msra.mxu0 %v2127
        %2143 = vmatpush.bf16.msra.mxu0 %v2126
        %2144 = vmatpush.bf16.msra.mxu0 %v2125
        %2145 = vmatpush.bf16.msra.mxu0 %v2124
        %2146 = vmatpush.bf16.msra.mxu0 %v2123
        %2147 = vmatmul.bf16.gmra.mxu0 %v2083
        %v2148 = vpop.f32.mrf.mxu0
        %v2149 = vadd.f32 0.0, %v2148
        %v2150 = vpop.f32.mrf.mxu0
        %v2151 = vadd.f32 0.0, %v2150
        %2152 = vmatmul.bf16.gmra.mxu0 %v2084
        %v2153 = vpop.f32.mrf.mxu0
        %v2154 = vadd.f32 0.0, %v2153
        %v2155 = vpop.f32.mrf.mxu0
        %v2156 = vadd.f32 0.0, %v2155
        %2157 = vmatmul.bf16.gmra.mxu0 %v2085
        %v2158 = vpop.f32.mrf.mxu0
        %v2159 = vadd.f32 0.0, %v2158
        %v2160 = vpop.f32.mrf.mxu0
        %v2161 = vadd.f32 0.0, %v2160
        %2162 = vmatmul.bf16.gmra.mxu0 %v2086
        %v2163 = vpop.f32.mrf.mxu0
        %v2164 = vadd.f32 0.0, %v2163
        %v2165 = vpop.f32.mrf.mxu0
        %v2166 = vadd.f32 0.0, %v2165
        %2167 = vdwg.mxu0
        %v2168 = vadd.f32 %v2023, %v2149
        %v2169 = vadd.f32 %v2025, %v2151
        %v2170 = vadd.f32 %v2028, %v2154
        %v2171 = vadd.f32 %v2030, %v2156
        %v2172 = vadd.f32 %v2033, %v2159
        %v2173 = vadd.f32 %v2035, %v2161
        %v2174 = vadd.f32 %v2038, %v2164
        %v2175 = vadd.f32 %v2040, %v2166
        %v2176 = vld [vmem:[#allocation3] sm:$0xf]
        %v2177 = vld [vmem:[#allocation3 + $0x4] sm:$0x1]
        %v2178 = vld [vmem:[#allocation3 + $0x8] sm:$0xf]
        %v2179 = vld [vmem:[#allocation3 + $0xc] sm:$0x1]
        %v2180 = vld [vmem:[#allocation3 + $0x10] sm:$0xf]
        %v2181 = vld [vmem:[#allocation3 + $0x14] sm:$0x1]
        %v2182 = vld [vmem:[#allocation3 + $0x18] sm:$0xf]
        %v2183 = vld [vmem:[#allocation3 + $0x1c] sm:$0x1]
        %v2184 = vld [vmem:[#allocation3 + $0x20] sm:$0xf]
        %v2185 = vld [vmem:[#allocation3 + $0x24] sm:$0x1]
        %v2186 = vld [vmem:[#allocation3 + $0x28] sm:$0xf]
        %v2187 = vld [vmem:[#allocation3 + $0x2c] sm:$0x1]
        %v2188 = vld [vmem:[#allocation3 + $0x30] sm:$0xf]
        %v2189 = vld [vmem:[#allocation3 + $0x34] sm:$0x1]
        %v2190 = vld [vmem:[#allocation3 + $0x38] sm:$0xf]
        %v2191 = vld [vmem:[#allocation3 + $0x3c] sm:$0x1]
        %v2193 = vshrl.u32 %v2176, 16
        %v2195 = vrot.slane %v2193, 4
        %v2196 = vshll.u32 %v2176, 16
        %v2198 = vrot.slane %v2196, 5
        %v2199 = vor.u32 %v2195, %v2198
        %v2200 = vrot.slane %v2199, 4
        %v2202 = vshll.u32 %v2177, 16
        %v2204 = vrot.slane %v2202, 5
        %v2205 = vsel %vm1742, %v2200, %v2204
        %v2207 = vshrl.u32 %v2178, 16
        %v2209 = vrot.slane %v2207, 4
        %v2210 = vshll.u32 %v2178, 16
        %v2212 = vrot.slane %v2210, 5
        %v2213 = vor.u32 %v2209, %v2212
        %v2214 = vrot.slane %v2213, 4
        %v2216 = vshll.u32 %v2179, 16
        %v2218 = vrot.slane %v2216, 5
        %v2219 = vsel %vm1742, %v2214, %v2218
        %v2221 = vshrl.u32 %v2180, 16
        %v2223 = vrot.slane %v2221, 4
        %v2224 = vshll.u32 %v2180, 16
        %v2226 = vrot.slane %v2224, 5
        %v2227 = vor.u32 %v2223, %v2226
        %v2228 = vrot.slane %v2227, 4
        %v2230 = vshll.u32 %v2181, 16
        %v2232 = vrot.slane %v2230, 5
        %v2233 = vsel %vm1742, %v2228, %v2232
        %v2235 = vshrl.u32 %v2182, 16
        %v2237 = vrot.slane %v2235, 4
        %v2238 = vshll.u32 %v2182, 16
        %v2240 = vrot.slane %v2238, 5
        %v2241 = vor.u32 %v2237, %v2240
        %v2242 = vrot.slane %v2241, 4
        %v2244 = vshll.u32 %v2183, 16
        %v2246 = vrot.slane %v2244, 5
        %v2247 = vsel %vm1742, %v2242, %v2246
        %v2249 = vshrl.u32 %v2184, 16
        %v2251 = vrot.slane %v2249, 4
        %v2252 = vshll.u32 %v2184, 16
        %v2254 = vrot.slane %v2252, 5
        %v2255 = vor.u32 %v2251, %v2254
        %v2256 = vrot.slane %v2255, 4
        %v2258 = vshll.u32 %v2185, 16
        %v2260 = vrot.slane %v2258, 5
        %v2261 = vsel %vm1742, %v2256, %v2260
        %v2263 = vshrl.u32 %v2186, 16
        %v2265 = vrot.slane %v2263, 4
        %v2266 = vshll.u32 %v2186, 16
        %v2268 = vrot.slane %v2266, 5
        %v2269 = vor.u32 %v2265, %v2268
        %v2270 = vrot.slane %v2269, 4
        %v2272 = vshll.u32 %v2187, 16
        %v2274 = vrot.slane %v2272, 5
        %v2275 = vsel %vm1742, %v2270, %v2274
        %v2277 = vshrl.u32 %v2188, 16
        %v2279 = vrot.slane %v2277, 4
        %v2280 = vshll.u32 %v2188, 16
        %v2282 = vrot.slane %v2280, 5
        %v2283 = vor.u32 %v2279, %v2282
        %v2284 = vrot.slane %v2283, 4
        %v2286 = vshll.u32 %v2189, 16
        %v2288 = vrot.slane %v2286, 5
        %v2289 = vsel %vm1742, %v2284, %v2288
        %v2291 = vshrl.u32 %v2190, 16
        %v2293 = vrot.slane %v2291, 4
        %v2294 = vshll.u32 %v2190, 16
        %v2296 = vrot.slane %v2294, 5
        %v2297 = vor.u32 %v2293, %v2296
        %v2298 = vrot.slane %v2297, 4
        %v2300 = vshll.u32 %v2191, 16
        %v2302 = vrot.slane %v2300, 5
        %v2303 = vsel %vm1742, %v2298, %v2302
        %s2304 = scalar_lea.vmem %s7, 32
        %v2305 = vld [vmem:[%s2304] sm:$0xf]
        %v2306 = vld [vmem:[%s2304 + $0x4] sm:$0xf]
        %v2307 = vld [vmem:[%s2304 + $0x8] sm:$0xf]
        %v2308 = vld [vmem:[%s2304 + $0xc] sm:$0xf]
        %v2309 = vld [vmem:[%s2304 + $0x10] sm:$0xf]
        %v2310 = vld [vmem:[%s2304 + $0x14] sm:$0xf]
        %v2311 = vld [vmem:[%s2304 + $0x18] sm:$0xf]
        %v2312 = vld [vmem:[%s2304 + $0x1c] sm:$0xf]
        %v2313 = vunpack.c.l.b16 %v2205
        %v2314 = vunpack.c.l.b16 %v2219
        %v2315 = vunpack.c.l.b16 %v2233
        %v2316 = vunpack.c.l.b16 %v2247
        %v2317 = vunpack.c.l.b16 %v2261
        %v2318 = vunpack.c.l.b16 %v2275
        %v2319 = vunpack.c.l.b16 %v2289
        %v2320 = vunpack.c.l.b16 %v2303
        %v2321 = vpack.c.b16 %v2314, %v2313
        %v2322 = vpack.c.b16 %v2316, %v2315
        %v2323 = vpack.c.b16 %v2318, %v2317
        %v2324 = vpack.c.b16 %v2320, %v2319
        %v2333 = vunpack.c.l.b16 %v2305
        %v2334 = vunpack.c.l.b16 %v2306
        %v2335 = vunpack.c.l.b16 %v2307
        %v2336 = vunpack.c.l.b16 %v2308
        %v2337 = vunpack.c.l.b16 %v2309
        %v2338 = vunpack.c.l.b16 %v2310
        %v2339 = vunpack.c.l.b16 %v2311
        %v2340 = vunpack.c.l.b16 %v2312
        %v2341 = vpack.c.b16 %v2334, %v2333
        %v2342 = vpack.c.b16 %v2336, %v2335
        %v2343 = vpack.c.b16 %v2338, %v2337
        %v2344 = vpack.c.b16 %v2340, %v2339
        %v2350 = vsel %vm1899, %v2321, 0
        %v2353 = vsel %vm1899, %v2322, 0
        %v2356 = vsel %vm1899, %v2323, 0
        %v2359 = vsel %vm1899, %v2324, 0
        %2361 = vmatpush.bf16.msra.mxu0 0
        %2362 = vmatpush.bf16.msra.mxu0 0
        %2363 = vmatpush.bf16.msra.mxu0 0
        %2364 = vmatpush.bf16.msra.mxu0 0
        %2365 = vmatpush.bf16.msra.mxu0 %v2344
        %2366 = vmatpush.bf16.msra.mxu0 %v2343
        %2367 = vmatpush.bf16.msra.mxu0 %v2342
        %2368 = vmatpush.bf16.msra.mxu0 %v2341
        %2369 = vmatmul.bf16.gmra.mxu0 %v2350
        %v2370 = vpop.f32.mrf.mxu0
        %v2371 = vadd.f32 0.0, %v2370
        %v2372 = vpop.f32.mrf.mxu0
        %v2373 = vadd.f32 0.0, %v2372
        %2374 = vmatmul.bf16.gmra.mxu0 %v2353
        %v2375 = vpop.f32.mrf.mxu0
        %v2376 = vadd.f32 0.0, %v2375
        %v2377 = vpop.f32.mrf.mxu0
        %v2378 = vadd.f32 0.0, %v2377
        %2379 = vmatmul.bf16.gmra.mxu0 %v2356
        %v2380 = vpop.f32.mrf.mxu0
        %v2381 = vadd.f32 0.0, %v2380
        %v2382 = vpop.f32.mrf.mxu0
        %v2383 = vadd.f32 0.0, %v2382
        %2384 = vmatmul.bf16.gmra.mxu0 %v2359
        %v2385 = vpop.f32.mrf.mxu0
        %v2386 = vadd.f32 0.0, %v2385
        %v2387 = vpop.f32.mrf.mxu0
        %v2388 = vadd.f32 0.0, %v2387
        %2389 = vdwg.mxu0
        %v2390 = vadd.f32 %v2168, %v2371
        %v2391 = vadd.f32 %v2169, %v2373
        %v2392 = vadd.f32 %v2170, %v2376
        %v2393 = vadd.f32 %v2171, %v2378
        %v2394 = vadd.f32 %v2172, %v2381
        %v2395 = vadd.f32 %v2173, %v2383
        %v2396 = vadd.f32 %v2174, %v2386
        %v2397 = vadd.f32 %v2175, %v2388
        %s2398 = scalar_lea.vmem [#allocation2], 8
        %v2399 = vld [vmem:[%s2398] sm:$0xf]
        %v2400 = vld [vmem:[%s2398 + $0x8] sm:$0xf]
        %v2401 = vld [vmem:[%s2398 + $0x10] sm:$0xf]
        %v2402 = vld [vmem:[%s2398 + $0x18] sm:$0xf]
        %v2403 = vld [vmem:[%s2398 + $0x20] sm:$0xf]
        %v2404 = vld [vmem:[%s2398 + $0x28] sm:$0xf]
        %v2405 = vld [vmem:[%s2398 + $0x30] sm:$0xf]
        %v2406 = vld [vmem:[%s2398 + $0x38] sm:$0xf]
        %s2407 = scalar_lea.vmem %s6, 128
        %v2408 = vld [vmem:[%s2407] sm:$0xf]
        %v2409 = vld [vmem:[%s2407 + $0x4] sm:$0xf]
        %v2410 = vld [vmem:[%s2407 + $0x8] sm:$0xf]
        %v2411 = vld [vmem:[%s2407 + $0xc] sm:$0xf]
        %v2412 = vld [vmem:[%s2407 + $0x10] sm:$0xf]
        %v2413 = vld [vmem:[%s2407 + $0x14] sm:$0xf]
        %v2414 = vld [vmem:[%s2407 + $0x18] sm:$0xf]
        %v2415 = vld [vmem:[%s2407 + $0x1c] sm:$0xf]
        %v2416 = vld [vmem:[%s2407 + $0x20] sm:$0xf]
        %v2417 = vld [vmem:[%s2407 + $0x24] sm:$0xf]
        %v2418 = vld [vmem:[%s2407 + $0x28] sm:$0xf]
        %v2419 = vld [vmem:[%s2407 + $0x2c] sm:$0xf]
        %v2420 = vld [vmem:[%s2407 + $0x30] sm:$0xf]
        %v2421 = vld [vmem:[%s2407 + $0x34] sm:$0xf]
        %v2422 = vld [vmem:[%s2407 + $0x38] sm:$0xf]
        %v2423 = vld [vmem:[%s2407 + $0x3c] sm:$0xf]
        %v2432 = vunpack.c.l.b16 %v2399
        %v2433 = vunpack.c.l.b16 %v2400
        %v2434 = vunpack.c.l.b16 %v2401
        %v2435 = vunpack.c.l.b16 %v2402
        %v2436 = vunpack.c.l.b16 %v2403
        %v2437 = vunpack.c.l.b16 %v2404
        %v2438 = vunpack.c.l.b16 %v2405
        %v2439 = vunpack.c.l.b16 %v2406
        %v2440 = vpack.c.b16 %v2433, %v2432
        %v2441 = vpack.c.b16 %v2435, %v2434
        %v2442 = vpack.c.b16 %v2437, %v2436
        %v2443 = vpack.c.b16 %v2439, %v2438
        %v2464 = vunpack.c.l.b16 %v2408
        %v2465 = vunpack.c.l.b16 %v2409
        %v2466 = vunpack.c.l.b16 %v2410
        %v2467 = vunpack.c.l.b16 %v2411
        %v2468 = vunpack.c.l.b16 %v2412
        %v2469 = vunpack.c.l.b16 %v2413
        %v2470 = vunpack.c.l.b16 %v2414
        %v2471 = vunpack.c.l.b16 %v2415
        %v2472 = vunpack.c.l.b16 %v2416
        %v2473 = vunpack.c.l.b16 %v2417
        %v2474 = vunpack.c.l.b16 %v2418
        %v2475 = vunpack.c.l.b16 %v2419
        %v2476 = vunpack.c.l.b16 %v2420
        %v2477 = vunpack.c.l.b16 %v2421
        %v2478 = vunpack.c.l.b16 %v2422
        %v2479 = vunpack.c.l.b16 %v2423
        %v2480 = vpack.c.b16 %v2465, %v2464
        %v2481 = vpack.c.b16 %v2467, %v2466
        %v2482 = vpack.c.b16 %v2469, %v2468
        %v2483 = vpack.c.b16 %v2471, %v2470
        %v2484 = vpack.c.b16 %v2473, %v2472
        %v2485 = vpack.c.b16 %v2475, %v2474
        %v2486 = vpack.c.b16 %v2477, %v2476
        %v2487 = vpack.c.b16 %v2479, %v2478
        %2496 = vmatpush.bf16.msra.mxu0 %v2487
        %2497 = vmatpush.bf16.msra.mxu0 %v2486
        %2498 = vmatpush.bf16.msra.mxu0 %v2485
        %2499 = vmatpush.bf16.msra.mxu0 %v2484
        %2500 = vmatpush.bf16.msra.mxu0 %v2483
        %2501 = vmatpush.bf16.msra.mxu0 %v2482
        %2502 = vmatpush.bf16.msra.mxu0 %v2481
        %2503 = vmatpush.bf16.msra.mxu0 %v2480
        %2504 = vmatmul.bf16.gmra.mxu0 %v2440
        %v2505 = vpop.f32.mrf.mxu0
        %v2506 = vadd.f32 0.0, %v2505
        %v2507 = vpop.f32.mrf.mxu0
        %v2508 = vadd.f32 0.0, %v2507
        %2509 = vmatmul.bf16.gmra.mxu0 %v2441
        %v2510 = vpop.f32.mrf.mxu0
        %v2511 = vadd.f32 0.0, %v2510
        %v2512 = vpop.f32.mrf.mxu0
        %v2513 = vadd.f32 0.0, %v2512
        %2514 = vmatmul.bf16.gmra.mxu0 %v2442
        %v2515 = vpop.f32.mrf.mxu0
        %v2516 = vadd.f32 0.0, %v2515
        %v2517 = vpop.f32.mrf.mxu0
        %v2518 = vadd.f32 0.0, %v2517
        %2519 = vmatmul.bf16.gmra.mxu0 %v2443
        %v2520 = vpop.f32.mrf.mxu0
        %v2521 = vadd.f32 0.0, %v2520
        %v2522 = vpop.f32.mrf.mxu0
        %v2523 = vadd.f32 0.0, %v2522
        %2524 = vdwg.mxu0
        %v2525 = vadd.f32 %v2390, %v2506
        %v2526 = vadd.f32 %v2391, %v2508
        %v2527 = vadd.f32 %v2392, %v2511
        %v2528 = vadd.f32 %v2393, %v2513
        %v2529 = vadd.f32 %v2394, %v2516
        %v2530 = vadd.f32 %v2395, %v2518
        %v2531 = vadd.f32 %v2396, %v2521
        %v2532 = vadd.f32 %v2397, %v2523
        %v2533 = vld [vmem:[%s2398] sm:$0xf]
        %v2534 = vld [vmem:[%s2398 + $0x4] sm:$0x1]
        %v2535 = vld [vmem:[%s2398 + $0x8] sm:$0xf]
        %v2536 = vld [vmem:[%s2398 + $0xc] sm:$0x1]
        %v2537 = vld [vmem:[%s2398 + $0x10] sm:$0xf]
        %v2538 = vld [vmem:[%s2398 + $0x14] sm:$0x1]
        %v2539 = vld [vmem:[%s2398 + $0x18] sm:$0xf]
        %v2540 = vld [vmem:[%s2398 + $0x1c] sm:$0x1]
        %v2541 = vld [vmem:[%s2398 + $0x20] sm:$0xf]
        %v2542 = vld [vmem:[%s2398 + $0x24] sm:$0x1]
        %v2543 = vld [vmem:[%s2398 + $0x28] sm:$0xf]
        %v2544 = vld [vmem:[%s2398 + $0x2c] sm:$0x1]
        %v2545 = vld [vmem:[%s2398 + $0x30] sm:$0xf]
        %v2546 = vld [vmem:[%s2398 + $0x34] sm:$0x1]
        %v2547 = vld [vmem:[%s2398 + $0x38] sm:$0xf]
        %v2548 = vld [vmem:[%s2398 + $0x3c] sm:$0x1]
        %v2550 = vshrl.u32 %v2533, 16
        %v2552 = vrot.slane %v2550, 4
        %v2553 = vshll.u32 %v2533, 16
        %v2555 = vrot.slane %v2553, 5
        %v2556 = vor.u32 %v2552, %v2555
        %v2557 = vrot.slane %v2556, 4
        %v2559 = vshll.u32 %v2534, 16
        %v2561 = vrot.slane %v2559, 5
        %v2562 = vsel %vm1742, %v2557, %v2561
        %v2564 = vshrl.u32 %v2535, 16
        %v2566 = vrot.slane %v2564, 4
        %v2567 = vshll.u32 %v2535, 16
        %v2569 = vrot.slane %v2567, 5
        %v2570 = vor.u32 %v2566, %v2569
        %v2571 = vrot.slane %v2570, 4
        %v2573 = vshll.u32 %v2536, 16
        %v2575 = vrot.slane %v2573, 5
        %v2576 = vsel %vm1742, %v2571, %v2575
        %v2578 = vshrl.u32 %v2537, 16
        %v2580 = vrot.slane %v2578, 4
        %v2581 = vshll.u32 %v2537, 16
        %v2583 = vrot.slane %v2581, 5
        %v2584 = vor.u32 %v2580, %v2583
        %v2585 = vrot.slane %v2584, 4
        %v2587 = vshll.u32 %v2538, 16
        %v2589 = vrot.slane %v2587, 5
        %v2590 = vsel %vm1742, %v2585, %v2589
        %v2592 = vshrl.u32 %v2539, 16
        %v2594 = vrot.slane %v2592, 4
        %v2595 = vshll.u32 %v2539, 16
        %v2597 = vrot.slane %v2595, 5
        %v2598 = vor.u32 %v2594, %v2597
        %v2599 = vrot.slane %v2598, 4
        %v2601 = vshll.u32 %v2540, 16
        %v2603 = vrot.slane %v2601, 5
        %v2604 = vsel %vm1742, %v2599, %v2603
        %v2606 = vshrl.u32 %v2541, 16
        %v2608 = vrot.slane %v2606, 4
        %v2609 = vshll.u32 %v2541, 16
        %v2611 = vrot.slane %v2609, 5
        %v2612 = vor.u32 %v2608, %v2611
        %v2613 = vrot.slane %v2612, 4
        %v2615 = vshll.u32 %v2542, 16
        %v2617 = vrot.slane %v2615, 5
        %v2618 = vsel %vm1742, %v2613, %v2617
        %v2620 = vshrl.u32 %v2543, 16
        %v2622 = vrot.slane %v2620, 4
        %v2623 = vshll.u32 %v2543, 16
        %v2625 = vrot.slane %v2623, 5
        %v2626 = vor.u32 %v2622, %v2625
        %v2627 = vrot.slane %v2626, 4
        %v2629 = vshll.u32 %v2544, 16
        %v2631 = vrot.slane %v2629, 5
        %v2632 = vsel %vm1742, %v2627, %v2631
        %v2634 = vshrl.u32 %v2545, 16
        %v2636 = vrot.slane %v2634, 4
        %v2637 = vshll.u32 %v2545, 16
        %v2639 = vrot.slane %v2637, 5
        %v2640 = vor.u32 %v2636, %v2639
        %v2641 = vrot.slane %v2640, 4
        %v2643 = vshll.u32 %v2546, 16
        %v2645 = vrot.slane %v2643, 5
        %v2646 = vsel %vm1742, %v2641, %v2645
        %v2648 = vshrl.u32 %v2547, 16
        %v2650 = vrot.slane %v2648, 4
        %v2651 = vshll.u32 %v2547, 16
        %v2653 = vrot.slane %v2651, 5
        %v2654 = vor.u32 %v2650, %v2653
        %v2655 = vrot.slane %v2654, 4
        %v2657 = vshll.u32 %v2548, 16
        %v2659 = vrot.slane %v2657, 5
        %v2660 = vsel %vm1742, %v2655, %v2659
        %s2661 = scalar_lea.vmem %s7, 64
        %v2662 = vld [vmem:[%s2661] sm:$0xf]
        %v2663 = vld [vmem:[%s2661 + $0x4] sm:$0xf]
        %v2664 = vld [vmem:[%s2661 + $0x8] sm:$0xf]
        %v2665 = vld [vmem:[%s2661 + $0xc] sm:$0xf]
        %v2666 = vld [vmem:[%s2661 + $0x10] sm:$0xf]
        %v2667 = vld [vmem:[%s2661 + $0x14] sm:$0xf]
        %v2668 = vld [vmem:[%s2661 + $0x18] sm:$0xf]
        %v2669 = vld [vmem:[%s2661 + $0x1c] sm:$0xf]
        %v2670 = vunpack.c.l.b16 %v2562
        %v2671 = vunpack.c.l.b16 %v2576
        %v2672 = vunpack.c.l.b16 %v2590
        %v2673 = vunpack.c.l.b16 %v2604
        %v2674 = vunpack.c.l.b16 %v2618
        %v2675 = vunpack.c.l.b16 %v2632
        %v2676 = vunpack.c.l.b16 %v2646
        %v2677 = vunpack.c.l.b16 %v2660
        %v2678 = vpack.c.b16 %v2671, %v2670
        %v2679 = vpack.c.b16 %v2673, %v2672
        %v2680 = vpack.c.b16 %v2675, %v2674
        %v2681 = vpack.c.b16 %v2677, %v2676
        %v2690 = vunpack.c.l.b16 %v2662
        %v2691 = vunpack.c.l.b16 %v2663
        %v2692 = vunpack.c.l.b16 %v2664
        %v2693 = vunpack.c.l.b16 %v2665
        %v2694 = vunpack.c.l.b16 %v2666
        %v2695 = vunpack.c.l.b16 %v2667
        %v2696 = vunpack.c.l.b16 %v2668
        %v2697 = vunpack.c.l.b16 %v2669
        %v2698 = vpack.c.b16 %v2691, %v2690
        %v2699 = vpack.c.b16 %v2693, %v2692
        %v2700 = vpack.c.b16 %v2695, %v2694
        %v2701 = vpack.c.b16 %v2697, %v2696
        %v2707 = vsel %vm1899, %v2678, 0
        %v2710 = vsel %vm1899, %v2679, 0
        %v2713 = vsel %vm1899, %v2680, 0
        %v2716 = vsel %vm1899, %v2681, 0
        %2718 = vmatpush.bf16.msra.mxu0 0
        %2719 = vmatpush.bf16.msra.mxu0 0
        %2720 = vmatpush.bf16.msra.mxu0 0
        %2721 = vmatpush.bf16.msra.mxu0 0
        %2722 = vmatpush.bf16.msra.mxu0 %v2701
        %2723 = vmatpush.bf16.msra.mxu0 %v2700
        %2724 = vmatpush.bf16.msra.mxu0 %v2699
        %2725 = vmatpush.bf16.msra.mxu0 %v2698
        %2726 = vmatmul.bf16.gmra.mxu0 %v2707
        %v2727 = vpop.f32.mrf.mxu0
        %v2728 = vadd.f32 0.0, %v2727
        %v2729 = vpop.f32.mrf.mxu0
        %v2730 = vadd.f32 0.0, %v2729
        %2731 = vmatmul.bf16.gmra.mxu0 %v2710
        %v2732 = vpop.f32.mrf.mxu0
        %v2733 = vadd.f32 0.0, %v2732
        %v2734 = vpop.f32.mrf.mxu0
        %v2735 = vadd.f32 0.0, %v2734
        %2736 = vmatmul.bf16.gmra.mxu0 %v2713
        %v2737 = vpop.f32.mrf.mxu0
        %v2738 = vadd.f32 0.0, %v2737
        %v2739 = vpop.f32.mrf.mxu0
        %v2740 = vadd.f32 0.0, %v2739
        %2741 = vmatmul.bf16.gmra.mxu0 %v2716
        %v2742 = vpop.f32.mrf.mxu0
        %v2743 = vadd.f32 0.0, %v2742
        %v2744 = vpop.f32.mrf.mxu0
        %v2745 = vadd.f32 0.0, %v2744
        %2746 = vdwg.mxu0
        %v2747 = vadd.f32 %v2525, %v2728
        %v2748 = vadd.f32 %v2526, %v2730
        %v2749 = vadd.f32 %v2527, %v2733
        %v2750 = vadd.f32 %v2528, %v2735
        %v2751 = vadd.f32 %v2529, %v2738
        %v2752 = vadd.f32 %v2530, %v2740
        %v2753 = vadd.f32 %v2531, %v2743
        %v2754 = vadd.f32 %v2532, %v2745
        %v2755 = vld [vmem:[%s8] sm:$0x1]
        %v2757 = vperm.slane %v2755, 0
        %v2759 = vadd.f32 %v2747, %v2757
        %v2760 = vadd.f32 %v2748, %v2757
        %v2761 = vadd.f32 %v2749, %v2757
        %v2762 = vadd.f32 %v2750, %v2757
        %v2763 = vadd.f32 %v2751, %v2757
        %v2764 = vadd.f32 %v2752, %v2757
        %v2765 = vadd.f32 %v2753, %v2757
        %v2766 = vadd.f32 %v2754, %v2757
        %2767 = vst.msk [vmem:[%s340] sm:$0xff] %vm1899, %v2759
        %2768 = vst.msk [vmem:[%s340 + $0x8] sm:$0xff] %vm1899, %v2760
        %2769 = vst.msk [vmem:[%s340 + $0x10] sm:$0xff] %vm1899, %v2761
        %2770 = vst.msk [vmem:[%s340 + $0x18] sm:$0xff] %vm1899, %v2762
        %2771 = vst.msk [vmem:[%s340 + $0x20] sm:$0xff] %vm1899, %v2763
        %2772 = vst.msk [vmem:[%s340 + $0x28] sm:$0xff] %vm1899, %v2764
        %2773 = vst.msk [vmem:[%s340 + $0x30] sm:$0xff] %vm1899, %v2765
        %2774 = vst.msk [vmem:[%s340 + $0x38] sm:$0xff] %vm1899, %v2766
        %s2775 = sand.u32 %s230, 1
        %s2776 = scalar_lea.sflag [#allocation5], %s2775
        %s2777 = sand.u32 %s230, 1
        %s2778 = smul.addr %s2777, 64
        %s2779 = scalar_lea.vmem [#allocation4], %s2778
        // Predicated region
        $region57: #{downsample_forward.1} parent=55 // pred_check
          %p2780 = pneg %p240
        $region58: #{downsample_forward.1} parent=55 // pred_check_branch
          %2782 = sbr.rel (%p2780) target = $region60
        $region59: #{downsample_forward.1} parent=55 // pred_region
          %2784 = vsyncadd %s2776, 0
          %s2785 = smul.addr %s23, 8
          %s2786 = smul.addr %s2785, 8
          %s2787 = scalar_lea.hbm %s9, %s2786
          %s2788 = sshll.u32 %s2779, 4
          %s2789 = int_to_ptr.vmem [resolvable:$true] %s2788
          %s2790 = sshll.u32 %s2787, 4
          %s2791 = int_to_ptr.hbm [resolvable:$true] %s2790
          %2796 = dma.vmem_to_hbm [thread:$0]  %s2789, 1024, %s2791, %s2776, 128, 128, 8
        $region60: #{downsample_forward.1} parent=55 // pred_fallthru
          _
      $region56: #{downsample_forward.1} parent=5 // pred_fallthru
        _
      %p2797 = scmp.le.s32.totalorder 2, %s18
      // Predicated region
      $region61: #{downsample_forward.1} parent=5 // pred_check
        %p2798 = pneg %p2797
      $region62: #{downsample_forward.1} parent=5 // pred_check_branch
        %2800 = sbr.rel (%p2798) target = $region64
      $region63: #{downsample_forward.1} parent=5 // pred_region
        %s2801 = ssub.s32 %s18, 2
        // Predicated region
        $region65: #{downsample_forward.1} parent=63 // pred_check
          %p2802 = pneg %p246
        $region66: #{downsample_forward.1} parent=63 // pred_check_branch
          %2804 = sbr.rel (%p2802) target = $region68
        $region67: #{downsample_forward.1} parent=63 // pred_region
          %s2805 = sand.u32 %s231, 1
          %s2806 = scalar_lea.sflag [#allocation5], %s2805
          %s2807 = sand.u32 %s231, 1
          %s2808 = smul.addr %s2807, 64
          %s2809 = scalar_lea.vmem [#allocation4], %s2808
          %2811 = dma.done %s2806, 1024
        $region68: #{downsample_forward.1} parent=63 // pred_fallthru
          _
      $region64: #{downsample_forward.1} parent=5 // pred_fallthru
        _
    $region6: #{downsample_forward.1} parent=1 // loop_footer
      %s22 = sadd.s32 1, %s18
    $region7: #{downsample_forward.1} parent=1 // loop_footer_branch
      %17 = sbr.rel target = $region3
    $region8: #{downsample_forward.1} parent=1 // loop_exit
      _
    %2812 = vsyncpa [#allocation5], 1
    %s2813 = scalar_lea.sflag [#allocation5], 1
    %2814 = vsyncpa %s2813, 1

</llo_original>
